<compile_context>
chip_gen: v6e
topology: v6e:2x2x1
jax: 0.10.0
libtpu: 0.0.40
codegen_flags: <defaults>
</compile_context>

<pallas_src>
import math

import jax
import jax.numpy as jnp
import numpy as np
from jax.experimental import pallas as pl
from jax.experimental.pallas import tpu as pltpu

D_MODEL = 32
NHEADS = 4
HEAD_DIM = D_MODEL // NHEADS
DIM_FF = 64
LN_EPS = 1e-5

# ---- packed parameter slab layout (one DMA, fetched once: constant block) ---
# Weights stored pre-transposed (in_dim, out_dim), stacked along sublanes so
# every static slice starts at lane offset 0 and a sublane offset % 8 == 0.
R_WQ, R_WK, R_WV, R_WO = 0, 32, 64, 96        # each (32, 32)
R_W1 = 128                                     # (32, 64)
R_W2 = 160                                     # (64, 32)
R_VEC = 224                                    # bias / LN vectors, 8-row stride
_VEC_NAMES = ("bq", "bk", "bv", "bo", "b1", "b2", "g2", "be2", "g3", "be3")
SLAB_ROWS = R_VEC + 8 * len(_VEC_NAMES)        # 304
SLAB_COLS = 64


def _layer_norm(x, gamma, beta):
    mu = jnp.mean(x, axis=-1, keepdims=True)
    var = jnp.mean(jnp.square(x - mu), axis=-1, keepdims=True)
    return (x - mu) * jax.lax.rsqrt(var + LN_EPS) * gamma + beta


def _vec(slab_ref, idx, n):
    r = R_VEC + 8 * idx
    return slab_ref[r:r + 1, 0:n]              # (1, n), lane offset 0


def _make_kernel(has_qpos: bool, has_pos: bool):
    """Kernel specialized (Python-static) on pos / query_pos presence."""

    def kernel(q_ref, kv_ref, slab_ref, out_ref, o_scr):
        f32 = jnp.float32

        # ---- inputs: 2 merged streams (tgt[+qpos], memory[+pos]) ------------
        # NOTE: Lq / Lk multiples of 8 keep the (nb, L, D) <-> (nb*L, D)
        # reshapes free (sublane-tile aligned).
        if has_qpos:
            _, nb, lq, _ = q_ref.shape
            tgt = q_ref[0]                                        # (nb, lq, D)
            q_in = (tgt + q_ref[1]).reshape(nb * lq, D_MODEL)
        else:
            nb, lq, _ = q_ref.shape
            tgt = q_ref[...]
            q_in = tgt.reshape(nb * lq, D_MODEL)
        if has_pos:
            lk = kv_ref.shape[2]
            mem = kv_ref[0]                                       # (nb, lk, D)
            k_in = (mem + kv_ref[1]).reshape(nb * lk, D_MODEL)
        else:
            lk = kv_ref.shape[1]
            mem = kv_ref[...]
            k_in = mem.reshape(nb * lk, D_MODEL)
        m_q = nb * lq
        m_k = nb * lk
        v_in = mem.reshape(m_k, D_MODEL)
        tgt_f = tgt.reshape(m_q, D_MODEL)

        # ---- parameters from the single packed slab (static slices) ---------
        wqT = slab_ref[R_WQ:R_WQ + D_MODEL, 0:D_MODEL]
        wkT = slab_ref[R_WK:R_WK + D_MODEL, 0:D_MODEL]
        wvT = slab_ref[R_WV:R_WV + D_MODEL, 0:D_MODEL]
        woT = slab_ref[R_WO:R_WO + D_MODEL, 0:D_MODEL]
        w1T = slab_ref[R_W1:R_W1 + D_MODEL, 0:DIM_FF]
        w2T = slab_ref[R_W2:R_W2 + DIM_FF, 0:D_MODEL]
        bq = _vec(slab_ref, 0, D_MODEL)
        bk = _vec(slab_ref, 1, D_MODEL)
        bv = _vec(slab_ref, 2, D_MODEL)
        bo = _vec(slab_ref, 3, D_MODEL)
        b1 = _vec(slab_ref, 4, DIM_FF)
        b2 = _vec(slab_ref, 5, D_MODEL)
        g2 = _vec(slab_ref, 6, D_MODEL)
        be2 = _vec(slab_ref, 7, D_MODEL)
        g3 = _vec(slab_ref, 8, D_MODEL)
        be3 = _vec(slab_ref, 9, D_MODEL)

        # ---- Q/K/V projections on flattened (nb*L, D) slabs -----------------
        # 1/sqrt(HEAD_DIM) is already folded into wqT / bq at pack time.
        q = jnp.dot(q_in, wqT, preferred_element_type=f32) + bq
        k = jnp.dot(k_in, wkT, preferred_element_type=f32) + bk
        v = jnp.dot(v_in, wvT, preferred_element_type=f32) + bv
        q3 = q.reshape(nb, lq, D_MODEL)
        k3 = k.reshape(nb, lk, D_MODEL)
        v3 = v.reshape(nb, lk, D_MODEL)

        # ---- per-head attention, batched over nb -----------------------------
        # Head outputs land in a VMEM scratch at static lane offsets (store
        # slot) rather than jnp.concatenate (XLU shifts), so the XLU only
        # carries the softmax / LayerNorm reductions.
        for h in range(NHEADS):                                    # static unroll
            lo, hi = h * HEAD_DIM, (h + 1) * HEAD_DIM
            qh, kh, vh = q3[:, :, lo:hi], k3[:, :, lo:hi], v3[:, :, lo:hi]
            s = jnp.einsum("bqd,bkd->bqk", qh, kh,
                           preferred_element_type=f32)             # (nb, lq, lk)
            s = s - jnp.max(s, axis=-1, keepdims=True)
            p = jnp.exp(s)
            # exact normalization (approx reciprocal error compounds if stacked)
            p = p / jnp.sum(p, axis=-1, keepdims=True)
            o_scr[:, lo:hi] = jnp.einsum(
                "bqk,bkd->bqd", p, vh, preferred_element_type=f32
            ).reshape(m_q, HEAD_DIM)

        # one K=32 output projection
        attn = jnp.dot(o_scr[...], woT, preferred_element_type=f32) + bo

        # ---- residual + LayerNorm (norm2) ------------------------------------
        x = _layer_norm(tgt_f + attn, g2, be2)

        # ---- feed-forward: linear1 -> relu -> linear2 -------------------------
        h1 = jnp.maximum(jnp.dot(x, w1T, preferred_element_type=f32) + b1, 0.0)
        y = jnp.dot(h1, w2T, preferred_element_type=f32) + b2

        # ---- residual + LayerNorm (norm3) -------------------------------------
        out_ref[...] = _layer_norm(x + y, g3, be3).reshape(nb, lq, D_MODEL)

    return kernel


def ca_att_layer(tgt, memory, param_slab, pos=None, query_pos=None,
                 batch_block=32, batch_major=False):
    """CaAttLayer forward.

    Default layout matches the PyTorch module: tgt (Lq, B, D), memory (Lk, B, D),
    pos / query_pos optional in the same layouts; returns (Lq, B, D).
    Pass batch_major=True to provide / receive (B, L, D) tensors and skip the
    wrapper transposes (each one is a full HBM read+write pass).
    """
    if batch_major:
        tgt_b, mem_b, qpos_b, pos_b = tgt, memory, query_pos, pos
        B, Lq, D = tgt.shape
        Lk = memory.shape[1]
    else:
        Lq, B, D = tgt.shape
        Lk = memory.shape[0]
        to_bld = lambda a: None if a is None else jnp.transpose(a, (1, 0, 2))
        tgt_b, mem_b, qpos_b, pos_b = map(to_bld, (tgt, memory, query_pos, pos))
    assert D == D_MODEL
    has_qpos = qpos_b is not None
    has_pos = pos_b is not None

    # Batch fold: nb*Lq is the MXU M-dim (the only axis that can fill the MXU
    # here), but keep >=2 grid steps so the "parallel" axis can shard across
    # both v7x TensorCores.  batch_block=32 -> M=256 per step at Lq=8.
    nb = max(1, min(batch_block, (B + 1) // 2))
    bp = ((B + nb - 1) // nb) * nb
    if bp != B:
        # NOTE: zero padded batch rows go through softmax (uniform) and
        # LayerNorm (var=0 -> rsqrt(LN_EPS) * 0) -> finite, sliced off below.
        pad = lambda a: jnp.pad(a, ((0, bp - B), (0, 0), (0, 0)))
        tgt_b, mem_b = pad(tgt_b), pad(mem_b)
        qpos_b = pad(qpos_b) if has_qpos else None
        pos_b = pad(pos_b) if has_pos else None

    # Merge input streams: tgt+query_pos (and memory+pos) ride in ONE stacked
    # array each -> 2 wide per-step input DMAs instead of 4 narrow ones.  When
    # pos / query_pos is None nothing is stacked and no zero tensor is DMA'd.
    if has_qpos:
        q_in = jnp.stack([tgt_b, qpos_b], axis=0)                 # (2, bp, Lq, D)
        q_spec = pl.BlockSpec((2, nb, Lq, D_MODEL), lambda b: (0, b, 0, 0))
    else:
        q_in = tgt_b
        q_spec = pl.BlockSpec((nb, Lq, D_MODEL), lambda b: (b, 0, 0))
    if has_pos:
        kv_in = jnp.stack([mem_b, pos_b], axis=0)                 # (2, bp, Lk, D)
        kv_spec = pl.BlockSpec((2, nb, Lk, D_MODEL), lambda b: (0, b, 0, 0))
    else:
        kv_in = mem_b
        kv_spec = pl.BlockSpec((nb, Lk, D_MODEL), lambda b: (b, 0, 0))
    slab_spec = pl.BlockSpec((SLAB_ROWS, SLAB_COLS), lambda b: (0, 0))

    # Advisory cost estimate so XLA schedules the surrounding ops sensibly.
    m_q, m_k = bp * Lq, bp * Lk
    flops = 2 * (m_q * D_MODEL * D_MODEL            # Q proj
                 + 2 * m_k * D_MODEL * D_MODEL      # K, V proj
                 + 2 * bp * Lq * Lk * D_MODEL       # scores + PV (all heads)
                 + m_q * D_MODEL * D_MODEL          # O proj
                 + 2 * m_q * D_MODEL * DIM_FF)      # FFN
    transcendentals = bp * NHEADS * Lq * Lk + 2 * m_q
    bytes_accessed = 4 * (m_q * D_MODEL * (2 if has_qpos else 1)
                          + m_k * D_MODEL * (2 if has_pos else 1)
                          + m_q * D_MODEL
                          + SLAB_ROWS * SLAB_COLS)

    out = pl.pallas_call(
        _make_kernel(has_qpos, has_pos),
        out_shape=jax.ShapeDtypeStruct((bp, Lq, D_MODEL), jnp.float32),
        grid_spec=pltpu.PrefetchScalarGridSpec(
            num_scalar_prefetch=0,
            grid=(bp // nb,),
            in_specs=[q_spec, kv_spec, slab_spec],
            out_specs=pl.BlockSpec((nb, Lq, D_MODEL), lambda b: (b, 0, 0)),
            scratch_shapes=[pltpu.VMEM((nb * Lq, D_MODEL), jnp.float32)],
        ),
        compiler_params=pltpu.CompilerParams(
            dimension_semantics=("parallel",)),
        cost_estimate=pl.CostEstimate(
            flops=flops, transcendentals=transcendentals,
            bytes_accessed=bytes_accessed),
    )(q_in, kv_in, param_slab)

    out = out[:B]
    return out if batch_major else jnp.transpose(out, (1, 0, 2))


def init_params(key):
    """Deterministic synthetic parameters (PyTorch shapes, stored pre-transposed)."""
    ks = jax.random.split(key, 12)
    std = 0.05

    def lin(kw, kb, out_dim, in_dim):
        w = std * jax.random.normal(kw, (out_dim, in_dim), jnp.float32)  # torch (out,in)
        b = std * jax.random.normal(kb, (out_dim,), jnp.float32)
        return w.T, b.reshape(1, out_dim)                                # store (in,out)

    p = {}
    p["wqT"], p["bq"] = lin(ks[0], ks[1], D_MODEL, D_MODEL)
    p["wkT"], p["bk"] = lin(ks[2], ks[3], D_MODEL, D_MODEL)
    p["wvT"], p["bv"] = lin(ks[4], ks[5], D_MODEL, D_MODEL)
    p["woT"], p["bo"] = lin(ks[6], ks[7], D_MODEL, D_MODEL)
    p["w1T"], p["b1"] = lin(ks[8], ks[9], DIM_FF, D_MODEL)
    p["w2T"], p["b2"] = lin(ks[10], ks[11], D_MODEL, DIM_FF)
    # LayerNorm params (PyTorch default init: gamma=1, beta=0)
    p["g2"] = jnp.ones((1, D_MODEL), jnp.float32)
    p["be2"] = jnp.zeros((1, D_MODEL), jnp.float32)
    p["g3"] = jnp.ones((1, D_MODEL), jnp.float32)
    p["be3"] = jnp.zeros((1, D_MODEL), jnp.float32)
    return p


def pack_params(p):
    """Pack all weights / biases / LN params into one (304, 64) f32 slab.

    The softmax scale 1/sqrt(HEAD_DIM) is folded into WqT / bq here (exact).
    """
    scale = 1.0 / math.sqrt(HEAD_DIM)
    slab = np.zeros((SLAB_ROWS, SLAB_COLS), np.float32)
    slab[R_WQ:R_WQ + D_MODEL, 0:D_MODEL] = np.asarray(p["wqT"]) * scale
    slab[R_WK:R_WK + D_MODEL, 0:D_MODEL] = np.asarray(p["wkT"])
    slab[R_WV:R_WV + D_MODEL, 0:D_MODEL] = np.asarray(p["wvT"])
    slab[R_WO:R_WO + D_MODEL, 0:D_MODEL] = np.asarray(p["woT"])
    slab[R_W1:R_W1 + D_MODEL, 0:DIM_FF] = np.asarray(p["w1T"])
    slab[R_W2:R_W2 + DIM_FF, 0:D_MODEL] = np.asarray(p["w2T"])
    for i, name in enumerate(_VEC_NAMES):
        v = np.asarray(p[name]).reshape(-1)
        if name == "bq":
            v = v * scale
        slab[R_VEC + 8 * i, 0:v.shape[0]] = v
    return jnp.asarray(slab)


def reference(tgt, memory, p, pos, query_pos):
    """Pure-JAX reference for correctness check (unscaled params)."""
    q_in = jnp.transpose(tgt + query_pos, (1, 0, 2))
    k_in = jnp.transpose(memory + pos, (1, 0, 2))
    v_in = jnp.transpose(memory, (1, 0, 2))
    t = jnp.transpose(tgt, (1, 0, 2))
    q = q_in @ p["wqT"] + p["bq"]
    k = k_in @ p["wkT"] + p["bk"]
    v = v_in @ p["wvT"] + p["bv"]
    B, Lq, D = q.shape
    Lk = k.shape[1]
    rh = lambda a, L: a.reshape(B, L, NHEADS, HEAD_DIM).transpose(0, 2, 1, 3)
    qh, kh, vh = rh(q, Lq), rh(k, Lk), rh(v, Lk)
    s = jnp.einsum("bhqd,bhkd->bhqk", qh, kh) / math.sqrt(HEAD_DIM)
    a = jax.nn.softmax(s, axis=-1)
    o = jnp.einsum("bhqk,bhkd->bhqd", a, vh).transpose(0, 2, 1, 3).reshape(B, Lq, D)
    attn = o @ p["woT"] + p["bo"]
    x = _layer_norm(t + attn, p["g2"], p["be2"])
    y = jax.nn.relu(x @ p["w1T"] + p["b1"]) @ p["w2T"] + p["b2"]
    z = _layer_norm(x + y, p["g3"], p["be3"])
    return jnp.transpose(z, (1, 0, 2))


if __name__ == "__main__":
    key = jax.random.PRNGKey(0)
    k_p, k_t, k_m, k_qp, k_pos = jax.random.split(key, 5)

    B, LQ, LK = 2, 8, 16
    pdict = init_params(k_p)
    slab = pack_params(pdict)
    tgt = jax.random.normal(k_t, (LQ, B, D_MODEL), jnp.float32)
    memory = jax.random.normal(k_m, (LK, B, D_MODEL), jnp.float32)
    query_pos = jax.random.normal(k_qp, (LQ, B, D_MODEL), jnp.float32)
    pos = jax.random.normal(k_pos, (LK, B, D_MODEL), jnp.float32)

    # With pos / query_pos: stacked 2-stream inputs, 2 grid steps.
    out = jax.block_until_ready(
        ca_att_layer(tgt, memory, slab, pos=pos, query_pos=query_pos))
    ref = jax.block_until_ready(reference(tgt, memory, pdict, pos, query_pos))
    np.testing.assert_allclose(np.asarray(out), np.asarray(ref),
                               rtol=1e-3, atol=1e-3)

    # pos / query_pos = None: specialized kernel, no zero-tensor DMAs.
    out0 = jax.block_until_ready(ca_att_layer(tgt, memory, slab))
    ref0 = jax.block_until_ready(
        reference(tgt, memory, pdict, jnp.zeros_like(memory), jnp.zeros_like(tgt)))
    np.testing.assert_allclose(np.asarray(out0), np.asarray(ref0),
                               rtol=1e-3, atol=1e-3)

    print("KERNEL_OK")
</pallas_src>

<mosaic_0001>
module attributes {stable_mosaic.version = 11 : i64} {
  func.func @kernel(%arg0: i32, %arg1: memref<2x1x8x32xf32, #tpu.memory_space<vmem>>, %arg2: memref<2x1x16x32xf32, #tpu.memory_space<vmem>>, %arg3: memref<304x64xf32, #tpu.memory_space<vmem>>, %arg4: memref<1x8x32xf32, #tpu.memory_space<vmem>>, %arg5: memref<8x32xf32, #tpu.memory_space<vmem>>) attributes {dimension_semantics = [#tpu.dimension_semantics<parallel>], iteration_bounds = array<i64: 2>, scalar_prefetch = 0 : i64, scratch_operands = 1 : i64, tpu.core_type = #tpu.core_type<tc>, window_params = [{transform_indices = @transform_0, window_bounds = array<i64: 2, 1, 8, 32>}, {transform_indices = @transform_1, window_bounds = array<i64: 2, 1, 16, 32>}, {pipeline_mode = #tpu.pipeline_mode<synchronous>, transform_indices = @transform_2, window_bounds = array<i64: 304, 64>}, {transform_indices = @transform_3, window_bounds = array<i64: 1, 8, 32>}]} {
    %c0 = arith.constant 0 : index
    %c0_0 = arith.constant 0 : index
    %c0_1 = arith.constant 0 : index
    %c0_2 = arith.constant 0 : index
    %0 = vector.load %arg1[%c0, %c0_0, %c0_1, %c0_2] : memref<2x1x8x32xf32, #tpu.memory_space<vmem>>, vector<1x1x8x32xf32>
    %1 = vector.shape_cast %0 : vector<1x1x8x32xf32> to vector<1x8x32xf32>
    %c1 = arith.constant 1 : index
    %c0_3 = arith.constant 0 : index
    %c0_4 = arith.constant 0 : index
    %c0_5 = arith.constant 0 : index
    %2 = vector.load %arg1[%c1, %c0_3, %c0_4, %c0_5] : memref<2x1x8x32xf32, #tpu.memory_space<vmem>>, vector<1x1x8x32xf32>
    %3 = vector.shape_cast %2 : vector<1x1x8x32xf32> to vector<1x8x32xf32>
    %4 = arith.addf %1, %3 : vector<1x8x32xf32>
    %5 = vector.shape_cast %4 : vector<1x8x32xf32> to vector<8x32xf32>
    %c0_6 = arith.constant 0 : index
    %c0_7 = arith.constant 0 : index
    %c0_8 = arith.constant 0 : index
    %c0_9 = arith.constant 0 : index
    %6 = vector.load %arg2[%c0_6, %c0_7, %c0_8, %c0_9] : memref<2x1x16x32xf32, #tpu.memory_space<vmem>>, vector<1x1x16x32xf32>
    %7 = vector.shape_cast %6 : vector<1x1x16x32xf32> to vector<1x16x32xf32>
    %c1_10 = arith.constant 1 : index
    %c0_11 = arith.constant 0 : index
    %c0_12 = arith.constant 0 : index
    %c0_13 = arith.constant 0 : index
    %8 = vector.load %arg2[%c1_10, %c0_11, %c0_12, %c0_13] : memref<2x1x16x32xf32, #tpu.memory_space<vmem>>, vector<1x1x16x32xf32>
    %9 = vector.shape_cast %8 : vector<1x1x16x32xf32> to vector<1x16x32xf32>
    %10 = arith.addf %7, %9 : vector<1x16x32xf32>
    %11 = vector.shape_cast %10 : vector<1x16x32xf32> to vector<16x32xf32>
    %12 = vector.shape_cast %7 : vector<1x16x32xf32> to vector<16x32xf32>
    %13 = vector.shape_cast %1 : vector<1x8x32xf32> to vector<8x32xf32>
    %c0_14 = arith.constant 0 : index
    %c0_15 = arith.constant 0 : index
    %14 = vector.load %arg3[%c0_14, %c0_15] : memref<304x64xf32, #tpu.memory_space<vmem>>, vector<32x32xf32>
    %c32 = arith.constant 32 : index
    %c0_16 = arith.constant 0 : index
    %15 = vector.load %arg3[%c32, %c0_16] : memref<304x64xf32, #tpu.memory_space<vmem>>, vector<32x32xf32>
    %c64 = arith.constant 64 : index
    %c0_17 = arith.constant 0 : index
    %16 = vector.load %arg3[%c64, %c0_17] : memref<304x64xf32, #tpu.memory_space<vmem>>, vector<32x32xf32>
    %c96 = arith.constant 96 : index
    %c0_18 = arith.constant 0 : index
    %17 = vector.load %arg3[%c96, %c0_18] : memref<304x64xf32, #tpu.memory_space<vmem>>, vector<32x32xf32>
    %c128 = arith.constant 128 : index
    %c0_19 = arith.constant 0 : index
    %18 = vector.load %arg3[%c128, %c0_19] : memref<304x64xf32, #tpu.memory_space<vmem>>, vector<32x64xf32>
    %c160 = arith.constant 160 : index
    %c0_20 = arith.constant 0 : index
    %19 = vector.load %arg3[%c160, %c0_20] : memref<304x64xf32, #tpu.memory_space<vmem>>, vector<64x32xf32>
    %c224 = arith.constant 224 : index
    %c0_21 = arith.constant 0 : index
    %20 = vector.load %arg3[%c224, %c0_21] : memref<304x64xf32, #tpu.memory_space<vmem>>, vector<1x32xf32>
    %c232 = arith.constant 232 : index
    %c0_22 = arith.constant 0 : index
    %21 = vector.load %arg3[%c232, %c0_22] : memref<304x64xf32, #tpu.memory_space<vmem>>, vector<1x32xf32>
    %c240 = arith.constant 240 : index
    %c0_23 = arith.constant 0 : index
    %22 = vector.load %arg3[%c240, %c0_23] : memref<304x64xf32, #tpu.memory_space<vmem>>, vector<1x32xf32>
    %c248 = arith.constant 248 : index
    %c0_24 = arith.constant 0 : index
    %23 = vector.load %arg3[%c248, %c0_24] : memref<304x64xf32, #tpu.memory_space<vmem>>, vector<1x32xf32>
    %c256 = arith.constant 256 : index
    %c0_25 = arith.constant 0 : index
    %24 = vector.load %arg3[%c256, %c0_25] : memref<304x64xf32, #tpu.memory_space<vmem>>, vector<1x64xf32>
    %c264 = arith.constant 264 : index
    %c0_26 = arith.constant 0 : index
    %25 = vector.load %arg3[%c264, %c0_26] : memref<304x64xf32, #tpu.memory_space<vmem>>, vector<1x32xf32>
    %c272 = arith.constant 272 : index
    %c0_27 = arith.constant 0 : index
    %26 = vector.load %arg3[%c272, %c0_27] : memref<304x64xf32, #tpu.memory_space<vmem>>, vector<1x32xf32>
    %c280 = arith.constant 280 : index
    %c0_28 = arith.constant 0 : index
    %27 = vector.load %arg3[%c280, %c0_28] : memref<304x64xf32, #tpu.memory_space<vmem>>, vector<1x32xf32>
    %c288 = arith.constant 288 : index
    %c0_29 = arith.constant 0 : index
    %28 = vector.load %arg3[%c288, %c0_29] : memref<304x64xf32, #tpu.memory_space<vmem>>, vector<1x32xf32>
    %c296 = arith.constant 296 : index
    %c0_30 = arith.constant 0 : index
    %29 = vector.load %arg3[%c296, %c0_30] : memref<304x64xf32, #tpu.memory_space<vmem>>, vector<1x32xf32>
    %cst = arith.constant dense<0.000000e+00> : vector<8x32xf32>
    %30 = tpu.matmul %5, %14, %cst {dimension_numbers = #tpu.dot_dimension_numbers<[1], [0], [0], [1], [0, 0, 1, 1], [], []>} : vector<8x32xf32>, vector<32x32xf32>, vector<8x32xf32> -> vector<8x32xf32>
    %31 = vector.broadcast %20 : vector<1x32xf32> to vector<8x32xf32>
    %32 = arith.addf %30, %31 : vector<8x32xf32>
    %cst_31 = arith.constant dense<0.000000e+00> : vector<16x32xf32>
    %33 = tpu.matmul %11, %15, %cst_31 {dimension_numbers = #tpu.dot_dimension_numbers<[1], [0], [0], [1], [0, 0, 1, 1], [], []>} : vector<16x32xf32>, vector<32x32xf32>, vector<16x32xf32> -> vector<16x32xf32>
    %34 = vector.broadcast %21 : vector<1x32xf32> to vector<16x32xf32>
    %35 = arith.addf %33, %34 : vector<16x32xf32>
    %cst_32 = arith.constant dense<0.000000e+00> : vector<16x32xf32>
    %36 = tpu.matmul %12, %16, %cst_32 {dimension_numbers = #tpu.dot_dimension_numbers<[1], [0], [0], [1], [0, 0, 1, 1], [], []>} : vector<16x32xf32>, vector<32x32xf32>, vector<16x32xf32> -> vector<16x32xf32>
    %37 = vector.broadcast %22 : vector<1x32xf32> to vector<16x32xf32>
    %38 = arith.addf %36, %37 : vector<16x32xf32>
    %39 = vector.shape_cast %32 : vector<8x32xf32> to vector<1x8x32xf32>
    %40 = vector.shape_cast %35 : vector<16x32xf32> to vector<1x16x32xf32>
    %41 = vector.shape_cast %38 : vector<16x32xf32> to vector<1x16x32xf32>
    %42 = vector.extract_strided_slice %39 {offsets = [0, 0, 0], sizes = [1, 8, 8], strides = [1, 1, 1]} : vector<1x8x32xf32> to vector<1x8x8xf32>
    %43 = vector.extract_strided_slice %40 {offsets = [0, 0, 0], sizes = [1, 16, 8], strides = [1, 1, 1]} : vector<1x16x32xf32> to vector<1x16x8xf32>
    %44 = vector.extract_strided_slice %41 {offsets = [0, 0, 0], sizes = [1, 16, 8], strides = [1, 1, 1]} : vector<1x16x32xf32> to vector<1x16x8xf32>
    "tpu.trace_start"() <{level = 10 : i32, message = "bqd,bkd->bqk"}> : () -> ()
    %cst_33 = arith.constant dense<0.000000e+00> : vector<1x8x16xf32>
    %45 = tpu.matmul %42, %43, %cst_33 {dimension_numbers = #tpu.dot_dimension_numbers<[2], [2], [1], [1], [0, 0, 0, 1, 1, 1], [0], [0]>} : vector<1x8x8xf32>, vector<1x16x8xf32>, vector<1x8x16xf32> -> vector<1x8x16xf32>
    "tpu.trace_stop"() : () -> ()
    %cst_34 = arith.constant dense<0xFF800000> : vector<1x8xf32>
    %46 = vector.multi_reduction <maximumf>, %45, %cst_34 [2] : vector<1x8x16xf32> to vector<1x8xf32>
    %47 = vector.shape_cast %46 : vector<1x8xf32> to vector<1x8x1xf32>
    %48 = vector.broadcast %47 : vector<1x8x1xf32> to vector<1x8x16xf32>
    %49 = arith.subf %45, %48 : vector<1x8x16xf32>
    %50 = math.exp %49 : vector<1x8x16xf32>
    %cst_35 = arith.constant dense<0.000000e+00> : vector<1x8xf32>
    %51 = vector.multi_reduction <add>, %50, %cst_35 [2] : vector<1x8x16xf32> to vector<1x8xf32>
    %52 = vector.shape_cast %51 : vector<1x8xf32> to vector<1x8x1xf32>
    %53 = vector.broadcast %52 : vector<1x8x1xf32> to vector<1x8x16xf32>
    %54 = arith.divf %50, %53 : vector<1x8x16xf32>
    "tpu.trace_start"() <{level = 10 : i32, message = "bqk,bkd->bqd"}> : () -> ()
    %cst_36 = arith.constant dense<0.000000e+00> : vector<1x8x8xf32>
    %55 = tpu.matmul %54, %44, %cst_36 {dimension_numbers = #tpu.dot_dimension_numbers<[2], [1], [1], [2], [0, 0, 0, 1, 1, 2], [0], [0]>} : vector<1x8x16xf32>, vector<1x16x8xf32>, vector<1x8x8xf32> -> vector<1x8x8xf32>
    "tpu.trace_stop"() : () -> ()
    %56 = vector.shape_cast %55 : vector<1x8x8xf32> to vector<8x8xf32>
    %c0_37 = arith.constant 0 : index
    %c0_38 = arith.constant 0 : index
    %57 = vector.load %arg5[%c0_37, %c0_38] : memref<8x32xf32, #tpu.memory_space<vmem>>, vector<8x8xf32>
    tpu.vector_store %arg5[%c0_37, %c0_38], %56 {strides = array<i32>} : memref<8x32xf32, #tpu.memory_space<vmem>>, vector<8x8xf32>,
    %58 = vector.extract_strided_slice %39 {offsets = [0, 0, 8], sizes = [1, 8, 8], strides = [1, 1, 1]} : vector<1x8x32xf32> to vector<1x8x8xf32>
    %59 = vector.extract_strided_slice %40 {offsets = [0, 0, 8], sizes = [1, 16, 8], strides = [1, 1, 1]} : vector<1x16x32xf32> to vector<1x16x8xf32>
    %60 = vector.extract_strided_slice %41 {offsets = [0, 0, 8], sizes = [1, 16, 8], strides = [1, 1, 1]} : vector<1x16x32xf32> to vector<1x16x8xf32>
    "tpu.trace_start"() <{level = 10 : i32, message = "bqd,bkd->bqk"}> : () -> ()
    %cst_39 = arith.constant dense<0.000000e+00> : vector<1x8x16xf32>
    %61 = tpu.matmul %58, %59, %cst_39 {dimension_numbers = #tpu.dot_dimension_numbers<[2], [2], [1], [1], [0, 0, 0, 1, 1, 1], [0], [0]>} : vector<1x8x8xf32>, vector<1x16x8xf32>, vector<1x8x16xf32> -> vector<1x8x16xf32>
    "tpu.trace_stop"() : () -> ()
    %cst_40 = arith.constant dense<0xFF800000> : vector<1x8xf32>
    %62 = vector.multi_reduction <maximumf>, %61, %cst_40 [2] : vector<1x8x16xf32> to vector<1x8xf32>
    %63 = vector.shape_cast %62 : vector<1x8xf32> to vector<1x8x1xf32>
    %64 = vector.broadcast %63 : vector<1x8x1xf32> to vector<1x8x16xf32>
    %65 = arith.subf %61, %64 : vector<1x8x16xf32>
    %66 = math.exp %65 : vector<1x8x16xf32>
    %cst_41 = arith.constant dense<0.000000e+00> : vector<1x8xf32>
    %67 = vector.multi_reduction <add>, %66, %cst_41 [2] : vector<1x8x16xf32> to vector<1x8xf32>
    %68 = vector.shape_cast %67 : vector<1x8xf32> to vector<1x8x1xf32>
    %69 = vector.broadcast %68 : vector<1x8x1xf32> to vector<1x8x16xf32>
    %70 = arith.divf %66, %69 : vector<1x8x16xf32>
    "tpu.trace_start"() <{level = 10 : i32, message = "bqk,bkd->bqd"}> : () -> ()
    %cst_42 = arith.constant dense<0.000000e+00> : vector<1x8x8xf32>
    %71 = tpu.matmul %70, %60, %cst_42 {dimension_numbers = #tpu.dot_dimension_numbers<[2], [1], [1], [2], [0, 0, 0, 1, 1, 2], [0], [0]>} : vector<1x8x16xf32>, vector<1x16x8xf32>, vector<1x8x8xf32> -> vector<1x8x8xf32>
    "tpu.trace_stop"() : () -> ()
    %72 = vector.shape_cast %71 : vector<1x8x8xf32> to vector<8x8xf32>
    %c0_43 = arith.constant 0 : index
    %c8 = arith.constant 8 : index
    %73 = vector.load %arg5[%c0_43, %c8] : memref<8x32xf32, #tpu.memory_space<vmem>>, vector<8x8xf32>
    tpu.vector_store %arg5[%c0_43, %c8], %72 {strides = array<i32>} : memref<8x32xf32, #tpu.memory_space<vmem>>, vector<8x8xf32>,
    %74 = vector.extract_strided_slice %39 {offsets = [0, 0, 16], sizes = [1, 8, 8], strides = [1, 1, 1]} : vector<1x8x32xf32> to vector<1x8x8xf32>
    %75 = vector.extract_strided_slice %40 {offsets = [0, 0, 16], sizes = [1, 16, 8], strides = [1, 1, 1]} : vector<1x16x32xf32> to vector<1x16x8xf32>
    %76 = vector.extract_strided_slice %41 {offsets = [0, 0, 16], sizes = [1, 16, 8], strides = [1, 1, 1]} : vector<1x16x32xf32> to vector<1x16x8xf32>
    "tpu.trace_start"() <{level = 10 : i32, message = "bqd,bkd->bqk"}> : () -> ()
    %cst_44 = arith.constant dense<0.000000e+00> : vector<1x8x16xf32>
    %77 = tpu.matmul %74, %75, %cst_44 {dimension_numbers = #tpu.dot_dimension_numbers<[2], [2], [1], [1], [0, 0, 0, 1, 1, 1], [0], [0]>} : vector<1x8x8xf32>, vector<1x16x8xf32>, vector<1x8x16xf32> -> vector<1x8x16xf32>
    "tpu.trace_stop"() : () -> ()
    %cst_45 = arith.constant dense<0xFF800000> : vector<1x8xf32>
    %78 = vector.multi_reduction <maximumf>, %77, %cst_45 [2] : vector<1x8x16xf32> to vector<1x8xf32>
    %79 = vector.shape_cast %78 : vector<1x8xf32> to vector<1x8x1xf32>
    %80 = vector.broadcast %79 : vector<1x8x1xf32> to vector<1x8x16xf32>
    %81 = arith.subf %77, %80 : vector<1x8x16xf32>
    %82 = math.exp %81 : vector<1x8x16xf32>
    %cst_46 = arith.constant dense<0.000000e+00> : vector<1x8xf32>
    %83 = vector.multi_reduction <add>, %82, %cst_46 [2] : vector<1x8x16xf32> to vector<1x8xf32>
    %84 = vector.shape_cast %83 : vector<1x8xf32> to vector<1x8x1xf32>
    %85 = vector.broadcast %84 : vector<1x8x1xf32> to vector<1x8x16xf32>
    %86 = arith.divf %82, %85 : vector<1x8x16xf32>
    "tpu.trace_start"() <{level = 10 : i32, message = "bqk,bkd->bqd"}> : () -> ()
    %cst_47 = arith.constant dense<0.000000e+00> : vector<1x8x8xf32>
    %87 = tpu.matmul %86, %76, %cst_47 {dimension_numbers = #tpu.dot_dimension_numbers<[2], [1], [1], [2], [0, 0, 0, 1, 1, 2], [0], [0]>} : vector<1x8x16xf32>, vector<1x16x8xf32>, vector<1x8x8xf32> -> vector<1x8x8xf32>
    "tpu.trace_stop"() : () -> ()
    %88 = vector.shape_cast %87 : vector<1x8x8xf32> to vector<8x8xf32>
    %c0_48 = arith.constant 0 : index
    %c16 = arith.constant 16 : index
    %89 = vector.load %arg5[%c0_48, %c16] : memref<8x32xf32, #tpu.memory_space<vmem>>, vector<8x8xf32>
    tpu.vector_store %arg5[%c0_48, %c16], %88 {strides = array<i32>} : memref<8x32xf32, #tpu.memory_space<vmem>>, vector<8x8xf32>,
    %90 = vector.extract_strided_slice %39 {offsets = [0, 0, 24], sizes = [1, 8, 8], strides = [1, 1, 1]} : vector<1x8x32xf32> to vector<1x8x8xf32>
    %91 = vector.extract_strided_slice %40 {offsets = [0, 0, 24], sizes = [1, 16, 8], strides = [1, 1, 1]} : vector<1x16x32xf32> to vector<1x16x8xf32>
    %92 = vector.extract_strided_slice %41 {offsets = [0, 0, 24], sizes = [1, 16, 8], strides = [1, 1, 1]} : vector<1x16x32xf32> to vector<1x16x8xf32>
    "tpu.trace_start"() <{level = 10 : i32, message = "bqd,bkd->bqk"}> : () -> ()
    %cst_49 = arith.constant dense<0.000000e+00> : vector<1x8x16xf32>
    %93 = tpu.matmul %90, %91, %cst_49 {dimension_numbers = #tpu.dot_dimension_numbers<[2], [2], [1], [1], [0, 0, 0, 1, 1, 1], [0], [0]>} : vector<1x8x8xf32>, vector<1x16x8xf32>, vector<1x8x16xf32> -> vector<1x8x16xf32>
    "tpu.trace_stop"() : () -> ()
    %cst_50 = arith.constant dense<0xFF800000> : vector<1x8xf32>
    %94 = vector.multi_reduction <maximumf>, %93, %cst_50 [2] : vector<1x8x16xf32> to vector<1x8xf32>
    %95 = vector.shape_cast %94 : vector<1x8xf32> to vector<1x8x1xf32>
    %96 = vector.broadcast %95 : vector<1x8x1xf32> to vector<1x8x16xf32>
    %97 = arith.subf %93, %96 : vector<1x8x16xf32>
    %98 = math.exp %97 : vector<1x8x16xf32>
    %cst_51 = arith.constant dense<0.000000e+00> : vector<1x8xf32>
    %99 = vector.multi_reduction <add>, %98, %cst_51 [2] : vector<1x8x16xf32> to vector<1x8xf32>
    %100 = vector.shape_cast %99 : vector<1x8xf32> to vector<1x8x1xf32>
    %101 = vector.broadcast %100 : vector<1x8x1xf32> to vector<1x8x16xf32>
    %102 = arith.divf %98, %101 : vector<1x8x16xf32>
    "tpu.trace_start"() <{level = 10 : i32, message = "bqk,bkd->bqd"}> : () -> ()
    %cst_52 = arith.constant dense<0.000000e+00> : vector<1x8x8xf32>
    %103 = tpu.matmul %102, %92, %cst_52 {dimension_numbers = #tpu.dot_dimension_numbers<[2], [1], [1], [2], [0, 0, 0, 1, 1, 2], [0], [0]>} : vector<1x8x16xf32>, vector<1x16x8xf32>, vector<1x8x8xf32> -> vector<1x8x8xf32>
    "tpu.trace_stop"() : () -> ()
    %104 = vector.shape_cast %103 : vector<1x8x8xf32> to vector<8x8xf32>
    %c0_53 = arith.constant 0 : index
    %c24 = arith.constant 24 : index
    %105 = vector.load %arg5[%c0_53, %c24] : memref<8x32xf32, #tpu.memory_space<vmem>>, vector<8x8xf32>
    tpu.vector_store %arg5[%c0_53, %c24], %104 {strides = array<i32>} : memref<8x32xf32, #tpu.memory_space<vmem>>, vector<8x8xf32>,
    %c0_54 = arith.constant 0 : index
    %c0_55 = arith.constant 0 : index
    %106 = vector.load %arg5[%c0_54, %c0_55] : memref<8x32xf32, #tpu.memory_space<vmem>>, vector<8x32xf32>
    %cst_56 = arith.constant dense<0.000000e+00> : vector<8x32xf32>
    %107 = tpu.matmul %106, %17, %cst_56 {dimension_numbers = #tpu.dot_dimension_numbers<[1], [0], [0], [1], [0, 0, 1, 1], [], []>} : vector<8x32xf32>, vector<32x32xf32>, vector<8x32xf32> -> vector<8x32xf32>
    %108 = vector.broadcast %23 : vector<1x32xf32> to vector<8x32xf32>
    %109 = arith.addf %107, %108 : vector<8x32xf32>
    %110 = arith.addf %13, %109 : vector<8x32xf32>
    %cst_57 = arith.constant dense<0.000000e+00> : vector<8xf32>
    %111 = vector.multi_reduction <add>, %110, %cst_57 [1] : vector<8x32xf32> to vector<8xf32>
    %112 = vector.shape_cast %111 : vector<8xf32> to vector<8x1xf32>
    %cst_58 = arith.constant 3.200000e+01 : f32
    %113 = vector.broadcast %cst_58 : f32 to vector<8x1xf32>
    %114 = arith.divf %112, %113 : vector<8x1xf32>
    %115 = vector.broadcast %114 : vector<8x1xf32> to vector<8x32xf32>
    %116 = arith.subf %110, %115 : vector<8x32xf32>
    %117 = arith.mulf %116, %116 : vector<8x32xf32>
    %cst_59 = arith.constant dense<0.000000e+00> : vector<8xf32>
    %118 = vector.multi_reduction <add>, %117, %cst_59 [1] : vector<8x32xf32> to vector<8xf32>
    %119 = vector.shape_cast %118 : vector<8xf32> to vector<8x1xf32>
    %cst_60 = arith.constant 3.200000e+01 : f32
    %120 = vector.broadcast %cst_60 : f32 to vector<8x1xf32>
    %121 = arith.divf %119, %120 : vector<8x1xf32>
    %122 = vector.broadcast %114 : vector<8x1xf32> to vector<8x32xf32>
    %123 = arith.subf %110, %122 : vector<8x32xf32>
    %cst_61 = arith.constant 9.99999974E-6 : f32
    %124 = vector.broadcast %cst_61 : f32 to vector<8x1xf32>
    %125 = arith.addf %121, %124 : vector<8x1xf32>
    %126 = math.rsqrt %125 : vector<8x1xf32>
    %127 = vector.broadcast %126 : vector<8x1xf32> to vector<8x32xf32>
    %128 = arith.mulf %123, %127 : vector<8x32xf32>
    %129 = vector.broadcast %26 : vector<1x32xf32> to vector<8x32xf32>
    %130 = arith.mulf %128, %129 : vector<8x32xf32>
    %131 = vector.broadcast %27 : vector<1x32xf32> to vector<8x32xf32>
    %132 = arith.addf %130, %131 : vector<8x32xf32>
    %cst_62 = arith.constant dense<0.000000e+00> : vector<8x64xf32>
    %133 = tpu.matmul %132, %18, %cst_62 {dimension_numbers = #tpu.dot_dimension_numbers<[1], [0], [0], [1], [0, 0, 1, 1], [], []>} : vector<8x32xf32>, vector<32x64xf32>, vector<8x64xf32> -> vector<8x64xf32>
    %134 = vector.broadcast %24 : vector<1x64xf32> to vector<8x64xf32>
    %135 = arith.addf %133, %134 : vector<8x64xf32>
    %cst_63 = arith.constant 0.000000e+00 : f32
    %136 = vector.broadcast %cst_63 : f32 to vector<8x64xf32>
    %137 = arith.maximumf %135, %136 : vector<8x64xf32>
    %cst_64 = arith.constant dense<0.000000e+00> : vector<8x32xf32>
    %138 = tpu.matmul %137, %19, %cst_64 {dimension_numbers = #tpu.dot_dimension_numbers<[1], [0], [0], [1], [0, 0, 1, 1], [], []>} : vector<8x64xf32>, vector<64x32xf32>, vector<8x32xf32> -> vector<8x32xf32>
    %139 = vector.broadcast %25 : vector<1x32xf32> to vector<8x32xf32>
    %140 = arith.addf %138, %139 : vector<8x32xf32>
    %141 = arith.addf %132, %140 : vector<8x32xf32>
    %cst_65 = arith.constant dense<0.000000e+00> : vector<8xf32>
    %142 = vector.multi_reduction <add>, %141, %cst_65 [1] : vector<8x32xf32> to vector<8xf32>
    %143 = vector.shape_cast %142 : vector<8xf32> to vector<8x1xf32>
    %cst_66 = arith.constant 3.200000e+01 : f32
    %144 = vector.broadcast %cst_66 : f32 to vector<8x1xf32>
    %145 = arith.divf %143, %144 : vector<8x1xf32>
    %146 = vector.broadcast %145 : vector<8x1xf32> to vector<8x32xf32>
    %147 = arith.subf %141, %146 : vector<8x32xf32>
    %148 = arith.mulf %147, %147 : vector<8x32xf32>
    %cst_67 = arith.constant dense<0.000000e+00> : vector<8xf32>
    %149 = vector.multi_reduction <add>, %148, %cst_67 [1] : vector<8x32xf32> to vector<8xf32>
    %150 = vector.shape_cast %149 : vector<8xf32> to vector<8x1xf32>
    %cst_68 = arith.constant 3.200000e+01 : f32
    %151 = vector.broadcast %cst_68 : f32 to vector<8x1xf32>
    %152 = arith.divf %150, %151 : vector<8x1xf32>
    %153 = vector.broadcast %145 : vector<8x1xf32> to vector<8x32xf32>
    %154 = arith.subf %141, %153 : vector<8x32xf32>
    %cst_69 = arith.constant 9.99999974E-6 : f32
    %155 = vector.broadcast %cst_69 : f32 to vector<8x1xf32>
    %156 = arith.addf %152, %155 : vector<8x1xf32>
    %157 = math.rsqrt %156 : vector<8x1xf32>
    %158 = vector.broadcast %157 : vector<8x1xf32> to vector<8x32xf32>
    %159 = arith.mulf %154, %158 : vector<8x32xf32>
    %160 = vector.broadcast %28 : vector<1x32xf32> to vector<8x32xf32>
    %161 = arith.mulf %159, %160 : vector<8x32xf32>
    %162 = vector.broadcast %29 : vector<1x32xf32> to vector<8x32xf32>
    %163 = arith.addf %161, %162 : vector<8x32xf32>
    %164 = vector.shape_cast %163 : vector<8x32xf32> to vector<1x8x32xf32>
    %c0_70 = arith.constant 0 : index
    %c0_71 = arith.constant 0 : index
    %c0_72 = arith.constant 0 : index
    %165 = vector.load %arg4[%c0_70, %c0_71, %c0_72] : memref<1x8x32xf32, #tpu.memory_space<vmem>>, vector<1x8x32xf32>
    tpu.vector_store %arg4[%c0_70, %c0_71, %c0_72], %164 {strides = array<i32>} : memref<1x8x32xf32, #tpu.memory_space<vmem>>, vector<1x8x32xf32>,
    return
  }
  func.func @transform_0(%arg0: i32) -> (i32, i32, i32, i32) {
    %c0_i32 = arith.constant 0 : i32
    %c0_i32_0 = arith.constant 0 : i32
    %c0_i32_1 = arith.constant 0 : i32
    %c0_i32_2 = arith.constant 0 : i32
    return %c0_i32, %arg0, %c0_i32_0, %c0_i32_1 : i32, i32, i32, i32
  }
  func.func @transform_1(%arg0: i32) -> (i32, i32, i32, i32) {
    %c0_i32 = arith.constant 0 : i32
    %c0_i32_0 = arith.constant 0 : i32
    %c0_i32_1 = arith.constant 0 : i32
    %c0_i32_2 = arith.constant 0 : i32
    return %c0_i32, %arg0, %c0_i32_0, %c0_i32_1 : i32, i32, i32, i32
  }
  func.func @transform_2(%arg0: i32) -> (i32, i32) {
    %c0_i32 = arith.constant 0 : i32
    %c0_i32_0 = arith.constant 0 : i32
    %c0_i32_1 = arith.constant 0 : i32
    return %c0_i32, %c0_i32_0 : i32, i32
  }
  func.func @transform_3(%arg0: i32) -> (i32, i32, i32) {
    %c0_i32 = arith.constant 0 : i32
    %c0_i32_0 = arith.constant 0 : i32
    %c0_i32_1 = arith.constant 0 : i32
    return %arg0, %c0_i32, %c0_i32_0 : i32, i32, i32
  }
}

</mosaic_0001>

<llo_original>
// kernel: tpu_custom_call.1
$region0: #{tpu_custom_call.1}
  #allocation0 [shape = 'u32[]', space=smem, size = 0x4, offset = 0x4, fixed_abs, tag = 'smem constant byte address 0x4 - core index']
  #allocation1 [shape = 'u32[144,128]{1,0:T(1,128)}', space=vmem, size = 0x12000, scoped, tag = 'internal scratch']
  #allocation2 [shape = 'f32[8,32]{1,0:T(8,128)}', space=vmem, size = 0x1000, scoped, tag = 'scratch operand']
  %s0 = inlined_call_operand.vmem [shape: f32[2,2,8,32], index: 0, kind: input, shape index: {}]
  %s1 = inlined_call_operand.vmem [shape: f32[2,2,16,32], index: 1, kind: input, shape index: {}]
  %s2 = inlined_call_operand.vmem [shape: f32[304,64], index: 2, kind: input, shape index: {}]
  %s3 = inlined_call_operand.hbm [shape: f32[2,8,32], index: 3, kind: output, shape index: {}]
  %s4 = sld [smem:[#allocation0]]
  $region121: #{tpu_custom_call.1} parent=0
    _
  %s6 = ssub.s32 1, %s4
  %s7 = scalar_select 0, %s6, %s4
  $region1: #{tpu_custom_call.1} parent=0
    #allocation3 [shape = 'u8[16384]{0}', space=vmem, size = 0x4000, scoped, tag = 'input window, operand 0']
    #allocation4 [shape = 'u8[32768]{0}', space=vmem, size = 0x8000, scoped, tag = 'input window, operand 1']
    #allocation5 [shape = 'u8[8192]{0}', space=vmem, size = 0x2000, scoped, tag = 'output window, operand 0']
    #allocation6 [shape = 's32[2]{0}', space=sflag, size = 0x8, scoped, tag = 'scoped memory for tpu_custom_call.1']
    %8 = vsyncpa [#allocation6], 0
    %s9 = scalar_lea.sflag [#allocation6], 1
    %10 = vsyncpa %s9, 0
    loop: start=0, step=1, limit=4
    $region2: #{tpu_custom_call.1} parent=1 // loop_pre_header
      _
    $region3: #{tpu_custom_call.1} parent=1 // loop_header
      %s12 = sphi 0, %s16
      %p13 = scmp.ge.s32.totalorder %s12, 4
      %s22 = sphi 0, %s24
      %s25 = sphi 0, %s22
      %s26 = sphi 0, %s25
      %s42 = sphi 0, %s26
      %s48 = sphi 0, %s50
      %s51 = sphi 0, %s48
      %s52 = sphi 0, %s51
      %s68 = sphi 0, %s52
      %s72 = sphi 0, %s72
      %s74 = sphi 0, %s72
      %s75 = sphi 0, %s74
      %s89 = sphi 0, %s75
      %s95 = sphi 0, %s97
      %s98 = sphi 0, %s95
      %s99 = sphi 0, %s98
      %s115 = sphi 0, %s99
    $region4: #{tpu_custom_call.1} parent=1 // loop_header_branch
      %15 = sbr.rel (%p13) target = $region8
    $region5: #{tpu_custom_call.1} parent=1 // loop_body
      %s17 = ssub.s32 %s12, 1
      %s18 = ssub.s32 %s12, 2
      %s19 = sadd.s32 %s12, 1
      %s20 = ssub.s32 %s12, %s19
      %p21 = scmp.eq.s32.totalorder %s20, 0
      %s23 = sadd.s32 %s22, 1
      %s24 = scalar_select %p21, %s22, %s23
      %p27 = pneg %p21
      %p28 = scmp.eq.s32.totalorder %s12, 1
      %p29 = por %p27, %p28
      %p30 = scmp.ne.s32.totalorder %s22, %s25
      %p31 = scmp.eq.s32.totalorder %s12, 0
      %p32 = por %p30, %p31
      %p33 = scmp.ne.s32.totalorder %s22, %s25
      %p34 = scmp.eq.s32.totalorder %s17, 1
      %p35 = por %p33, %p34
      %p36 = scmp.ne.s32.totalorder %s25, %s26
      %p37 = scmp.eq.s32.totalorder %s17, 0
      %p38 = por %p36, %p37
      %p39 = scmp.ne.s32.totalorder %s25, %s26
      %p40 = scmp.eq.s32.totalorder %s18, 1
      %p41 = por %p39, %p40
      %p43 = scmp.ne.s32.totalorder %s26, %s42
      %p44 = scmp.eq.s32.totalorder %s18, 0
      %p45 = por %p43, %p44
      %s46 = ssub.s32 %s12, %s19
      %p47 = scmp.eq.s32.totalorder %s46, 0
      %s49 = sadd.s32 %s48, 1
      %s50 = scalar_select %p47, %s48, %s49
      %p53 = pneg %p47
      %p54 = scmp.eq.s32.totalorder %s12, 1
      %p55 = por %p53, %p54
      %p56 = scmp.ne.s32.totalorder %s48, %s51
      %p57 = scmp.eq.s32.totalorder %s12, 0
      %p58 = por %p56, %p57
      %p59 = scmp.ne.s32.totalorder %s48, %s51
      %p60 = scmp.eq.s32.totalorder %s17, 1
      %p61 = por %p59, %p60
      %p62 = scmp.ne.s32.totalorder %s51, %s52
      %p63 = scmp.eq.s32.totalorder %s17, 0
      %p64 = por %p62, %p63
      %p65 = scmp.ne.s32.totalorder %s51, %s52
      %p66 = scmp.eq.s32.totalorder %s18, 1
      %p67 = por %p65, %p66
      %p69 = scmp.ne.s32.totalorder %s52, %s68
      %p70 = scmp.eq.s32.totalorder %s18, 0
      %p71 = por %p69, %p70
      %s73 = sadd.s32 %s72, 1
      %p76 = scmp.eq.s32.totalorder %s12, 1
      %p77 = scmp.ne.s32.totalorder %s72, %s74
      %p78 = scmp.eq.s32.totalorder %s12, 0
      %p79 = por %p77, %p78
      %p80 = scmp.ne.s32.totalorder %s72, %s74
      %p81 = scmp.eq.s32.totalorder %s17, 1
      %p82 = por %p80, %p81
      %p83 = scmp.ne.s32.totalorder %s74, %s75
      %p84 = scmp.eq.s32.totalorder %s17, 0
      %p85 = por %p83, %p84
      %p86 = scmp.ne.s32.totalorder %s74, %s75
      %p87 = scmp.eq.s32.totalorder %s18, 1
      %p88 = por %p86, %p87
      %p90 = scmp.ne.s32.totalorder %s75, %s89
      %p91 = scmp.eq.s32.totalorder %s18, 0
      %p92 = por %p90, %p91
      %s93 = ssub.s32 %s12, %s19
      %p94 = scmp.eq.s32.totalorder %s93, 0
      %s96 = sadd.s32 %s95, 1
      %s97 = scalar_select %p94, %s95, %s96
      %p100 = pneg %p94
      %p101 = scmp.eq.s32.totalorder %s12, 1
      %p102 = por %p100, %p101
      %p103 = scmp.ne.s32.totalorder %s95, %s98
      %p104 = scmp.eq.s32.totalorder %s12, 0
      %p105 = por %p103, %p104
      %p106 = scmp.ne.s32.totalorder %s95, %s98
      %p107 = scmp.eq.s32.totalorder %s17, 1
      %p108 = por %p106, %p107
      %p109 = scmp.ne.s32.totalorder %s98, %s99
      %p110 = scmp.eq.s32.totalorder %s17, 0
      %p111 = por %p109, %p110
      %p112 = scmp.ne.s32.totalorder %s98, %s99
      %p113 = scmp.eq.s32.totalorder %s18, 1
      %p114 = por %p112, %p113
      %p116 = scmp.ne.s32.totalorder %s99, %s115
      %p117 = scmp.eq.s32.totalorder %s18, 0
      %p118 = por %p116, %p117
      %p119 = scmp.le.s32.totalorder 1, %s12
      %p120 = scmp.lt.s32.totalorder %s12, 3
      %p121 = pnand %p119, %p120
      %p122 = pneg %p121
      // Predicated region
      $region9: #{tpu_custom_call.1} parent=5 // pred_check
        _
      $region10: #{tpu_custom_call.1} parent=5 // pred_check_branch
        %124 = sbr.rel (%p121) target = $region12
      $region11: #{tpu_custom_call.1} parent=5 // pred_region
        %s125 = ssub.s32 %s12, 1
        // Predicated region
        $region13: #{tpu_custom_call.1} parent=11 // pred_check
          %p126 = pneg %p85
        $region14: #{tpu_custom_call.1} parent=11 // pred_check_branch
          %128 = sbr.rel (%p126) target = $region16
        $region15: #{tpu_custom_call.1} parent=11 // pred_region
          _
        $region16: #{tpu_custom_call.1} parent=11 // pred_fallthru
          _
      $region12: #{tpu_custom_call.1} parent=5 // pred_fallthru
        _
      %p129 = scmp.lt.s32.totalorder %s12, 2
      // Predicated region
      $region17: #{tpu_custom_call.1} parent=5 // pred_check
        %p130 = pneg %p129
      $region18: #{tpu_custom_call.1} parent=5 // pred_check_branch
        %132 = sbr.rel (%p130) target = $region20
      $region19: #{tpu_custom_call.1} parent=5 // pred_region
        // Predicated region
        $region21: #{tpu_custom_call.1} parent=19 // pred_check
          %p133 = pneg %p32
        $region22: #{tpu_custom_call.1} parent=19 // pred_check_branch
          %135 = sbr.rel (%p133) target = $region24
        $region23: #{tpu_custom_call.1} parent=19 // pred_region
          %s136 = sand.u32 %s22, 1
          %s137 = sand.u32 %s22, 1
          %s138 = smul.addr %s137, 16
          %s139 = scalar_lea.vmem [#allocation3], %s138
          %s140 = smul.addr %s12, 8
          %s141 = scalar_lea.vmem %s0, %s140
          // Predicated region
          $region25: #{tpu_custom_call.1} parent=23 // pred_check
            _
          $region26: #{tpu_custom_call.1} parent=23 // pred_check_branch
            %143 = sbr.rel (0) target = $region28
          $region27: #{tpu_custom_call.1} parent=23 // pred_region
            // Predicated region
            $region29: #{tpu_custom_call.1} parent=27 // pred_check
              _
            $region30: #{tpu_custom_call.1} parent=27 // pred_check_branch
              %145 = sbr.rel (0) target = $region32
            $region31: #{tpu_custom_call.1} parent=27 // pred_region
              // Predicated region
              $region44: #{tpu_custom_call.1} parent=31 // pred_check
                _
              $region45: #{tpu_custom_call.1} parent=31 // pred_check_branch
                %163 = sbr.rel (0) target = $region47
              $region46: #{tpu_custom_call.1} parent=31 // pred_region
                loop: start=0, step=1, limit=1
                $region48: #{tpu_custom_call.1} parent=46 // loop_pre_header
                  _
                $region49: #{tpu_custom_call.1} parent=46 // loop_header
                  %s165 = sphi 0, %s169
                  %p166 = scmp.ge.s32.totalorder %s165, 1
                  %s170 = sphi %s141, %s141
                  %s171 = sphi %s139, %s139
                $region50: #{tpu_custom_call.1} parent=46 // loop_header_branch
                  %168 = sbr.rel (%p166) target = $region54
                $region51: #{tpu_custom_call.1} parent=46 // loop_body
                  %v172 = vld [vmem:[%s170] sm:$0xff]
                  %173 = vst [vmem:[%s171] sm:$0xff] %v172
                  %v174 = vld [vmem:[%s170 + $0x10] sm:$0xff]
                  %175 = vst [vmem:[%s171 + $0x8] sm:$0xff] %v174
                $region52: #{tpu_custom_call.1} parent=46 // loop_footer
                  %s169 = sadd.s32 1, %s165
                $region53: #{tpu_custom_call.1} parent=46 // loop_footer_branch
                  %164 = sbr.rel target = $region49
                $region54: #{tpu_custom_call.1} parent=46 // loop_exit
                  _
              $region47: #{tpu_custom_call.1} parent=31 // pred_fallthru
                _
              // Predicated region
              $region55: #{tpu_custom_call.1} parent=31 // pred_check
                _
              $region56: #{tpu_custom_call.1} parent=31 // pred_check_branch
                %177 = sbr.rel target = $region58
              $region57: #{tpu_custom_call.1} parent=31 // pred_region
                _
              $region58: #{tpu_custom_call.1} parent=31 // pred_fallthru
                _
            $region32: #{tpu_custom_call.1} parent=27 // pred_fallthru
              _
            // Predicated region
            $region33: #{tpu_custom_call.1} parent=27 // pred_check
              _
            $region34: #{tpu_custom_call.1} parent=27 // pred_check_branch
              %147 = sbr.rel target = $region36
            $region35: #{tpu_custom_call.1} parent=27 // pred_region
              %s149 = ssub.s32 256, 1
              loop: start=0, step=1, limit=1
              $region37: #{tpu_custom_call.1} parent=35 // loop_pre_header
                _
              $region38: #{tpu_custom_call.1} parent=35 // loop_header
                %s151 = sphi 0, %s155
                %p152 = scmp.ge.s32.totalorder %s151, 1
                %s156 = sphi %s141, %s141
                %s157 = sphi %s139, %s139
              $region39: #{tpu_custom_call.1} parent=35 // loop_header_branch
                %154 = sbr.rel (%p152) target = $region43
              $region40: #{tpu_custom_call.1} parent=35 // loop_body
                %v158 = vld [vmem:[%s156] sm:%s149]
                %159 = vst [vmem:[%s157] sm:%s149] %v158
                %v160 = vld [vmem:[%s156 + $0x10] sm:%s149]
                %161 = vst [vmem:[%s157 + $0x8] sm:%s149] %v160
              $region41: #{tpu_custom_call.1} parent=35 // loop_footer
                %s155 = sadd.s32 1, %s151
              $region42: #{tpu_custom_call.1} parent=35 // loop_footer_branch
                %150 = sbr.rel target = $region38
              $region43: #{tpu_custom_call.1} parent=35 // loop_exit
                _
            $region36: #{tpu_custom_call.1} parent=27 // pred_fallthru
              _
          $region28: #{tpu_custom_call.1} parent=23 // pred_fallthru
            _
          %178 = vnop
        $region24: #{tpu_custom_call.1} parent=19 // pred_fallthru
          _
        // Predicated region
        $region59: #{tpu_custom_call.1} parent=19 // pred_check
          %p179 = pneg %p58
        $region60: #{tpu_custom_call.1} parent=19 // pred_check_branch
          %181 = sbr.rel (%p179) target = $region62
        $region61: #{tpu_custom_call.1} parent=19 // pred_region
          %s182 = sand.u32 %s48, 1
          %s183 = sand.u32 %s48, 1
          %s184 = smul.addr %s183, 32
          %s185 = scalar_lea.vmem [#allocation4], %s184
          %s186 = smul.addr %s12, 2
          %s187 = smul.addr %s186, 8
          %s188 = scalar_lea.vmem %s1, %s187
          // Predicated region
          $region63: #{tpu_custom_call.1} parent=61 // pred_check
            _
          $region64: #{tpu_custom_call.1} parent=61 // pred_check_branch
            %190 = sbr.rel (0) target = $region66
          $region65: #{tpu_custom_call.1} parent=61 // pred_region
            // Predicated region
            $region67: #{tpu_custom_call.1} parent=65 // pred_check
              _
            $region68: #{tpu_custom_call.1} parent=65 // pred_check_branch
              %192 = sbr.rel (0) target = $region70
            $region69: #{tpu_custom_call.1} parent=65 // pred_region
              // Predicated region
              $region82: #{tpu_custom_call.1} parent=69 // pred_check
                _
              $region83: #{tpu_custom_call.1} parent=69 // pred_check_branch
                %214 = sbr.rel (0) target = $region85
              $region84: #{tpu_custom_call.1} parent=69 // pred_region
                loop: start=0, step=1, limit=1
                $region86: #{tpu_custom_call.1} parent=84 // loop_pre_header
                  _
                $region87: #{tpu_custom_call.1} parent=84 // loop_header
                  %s216 = sphi 0, %s220
                  %p217 = scmp.ge.s32.totalorder %s216, 1
                  %s221 = sphi %s188, %s188
                  %s222 = sphi %s185, %s185
                $region88: #{tpu_custom_call.1} parent=84 // loop_header_branch
                  %219 = sbr.rel (%p217) target = $region92
                $region89: #{tpu_custom_call.1} parent=84 // loop_body
                  %v223 = vld [vmem:[%s221] sm:$0xff]
                  %224 = vst [vmem:[%s222] sm:$0xff] %v223
                  %v225 = vld [vmem:[%s221 + $0x8] sm:$0xff]
                  %226 = vst [vmem:[%s222 + $0x8] sm:$0xff] %v225
                  %v227 = vld [vmem:[%s221 + $0x20] sm:$0xff]
                  %228 = vst [vmem:[%s222 + $0x10] sm:$0xff] %v227
                  %v229 = vld [vmem:[%s221 + $0x28] sm:$0xff]
                  %230 = vst [vmem:[%s222 + $0x18] sm:$0xff] %v229
                $region90: #{tpu_custom_call.1} parent=84 // loop_footer
                  %s220 = sadd.s32 1, %s216
                $region91: #{tpu_custom_call.1} parent=84 // loop_footer_branch
                  %215 = sbr.rel target = $region87
                $region92: #{tpu_custom_call.1} parent=84 // loop_exit
                  _
              $region85: #{tpu_custom_call.1} parent=69 // pred_fallthru
                _
              // Predicated region
              $region93: #{tpu_custom_call.1} parent=69 // pred_check
                _
              $region94: #{tpu_custom_call.1} parent=69 // pred_check_branch
                %232 = sbr.rel target = $region96
              $region95: #{tpu_custom_call.1} parent=69 // pred_region
                _
              $region96: #{tpu_custom_call.1} parent=69 // pred_fallthru
                _
            $region70: #{tpu_custom_call.1} parent=65 // pred_fallthru
              _
            // Predicated region
            $region71: #{tpu_custom_call.1} parent=65 // pred_check
              _
            $region72: #{tpu_custom_call.1} parent=65 // pred_check_branch
              %194 = sbr.rel target = $region74
            $region73: #{tpu_custom_call.1} parent=65 // pred_region
              %s196 = ssub.s32 256, 1
              loop: start=0, step=1, limit=1
              $region75: #{tpu_custom_call.1} parent=73 // loop_pre_header
                _
              $region76: #{tpu_custom_call.1} parent=73 // loop_header
                %s198 = sphi 0, %s202
                %p199 = scmp.ge.s32.totalorder %s198, 1
                %s203 = sphi %s188, %s188
                %s204 = sphi %s185, %s185
              $region77: #{tpu_custom_call.1} parent=73 // loop_header_branch
                %201 = sbr.rel (%p199) target = $region81
              $region78: #{tpu_custom_call.1} parent=73 // loop_body
                %v205 = vld [vmem:[%s203] sm:%s196]
                %206 = vst [vmem:[%s204] sm:%s196] %v205
                %v207 = vld [vmem:[%s203 + $0x8] sm:%s196]
                %208 = vst [vmem:[%s204 + $0x8] sm:%s196] %v207
                %v209 = vld [vmem:[%s203 + $0x20] sm:%s196]
                %210 = vst [vmem:[%s204 + $0x10] sm:%s196] %v209
                %v211 = vld [vmem:[%s203 + $0x28] sm:%s196]
                %212 = vst [vmem:[%s204 + $0x18] sm:%s196] %v211
              $region79: #{tpu_custom_call.1} parent=73 // loop_footer
                %s202 = sadd.s32 1, %s198
              $region80: #{tpu_custom_call.1} parent=73 // loop_footer_branch
                %197 = sbr.rel target = $region76
              $region81: #{tpu_custom_call.1} parent=73 // loop_exit
                _
            $region74: #{tpu_custom_call.1} parent=65 // pred_fallthru
              _
          $region66: #{tpu_custom_call.1} parent=61 // pred_fallthru
            _
          %233 = vnop
        $region62: #{tpu_custom_call.1} parent=19 // pred_fallthru
          _
      $region20: #{tpu_custom_call.1} parent=5 // pred_fallthru
        _
      %p234 = scmp.le.s32.totalorder 1, %s12
      %p235 = scmp.lt.s32.totalorder %s12, 3
      %p236 = pnand %p234, %p235
      %p237 = pneg %p236
      // Predicated region
      $region97: #{tpu_custom_call.1} parent=5 // pred_check
        _
      $region98: #{tpu_custom_call.1} parent=5 // pred_check_branch
        %239 = sbr.rel (%p236) target = $region100
      $region99: #{tpu_custom_call.1} parent=5 // pred_region
        %s240 = ssub.s32 %s12, 1
        %s241 = sand.u32 %s25, 1
        %s242 = sand.u32 %s25, 1
        %s243 = smul.addr %s242, 16
        %s244 = scalar_lea.vmem [#allocation3], %s243
        // Predicated region
        $region101: #{tpu_custom_call.1} parent=99 // pred_check
          %p245 = pneg %p38
        $region102: #{tpu_custom_call.1} parent=99 // pred_check_branch
          %247 = sbr.rel (%p245) target = $region104
        $region103: #{tpu_custom_call.1} parent=99 // pred_region
          _
        $region104: #{tpu_custom_call.1} parent=99 // pred_fallthru
          _
        %s248 = sand.u32 %s51, 1
        %s249 = sand.u32 %s51, 1
        %s250 = smul.addr %s249, 32
        %s251 = scalar_lea.vmem [#allocation4], %s250
        // Predicated region
        $region105: #{tpu_custom_call.1} parent=99 // pred_check
          %p252 = pneg %p64
        $region106: #{tpu_custom_call.1} parent=99 // pred_check_branch
          %254 = sbr.rel (%p252) target = $region108
        $region107: #{tpu_custom_call.1} parent=99 // pred_region
          _
        $region108: #{tpu_custom_call.1} parent=99 // pred_fallthru
          _
        %s255 = sand.u32 %s25, 1
        %s256 = sand.u32 %s25, 1
        %s257 = smul.addr %s256, 16
        %s258 = scalar_lea.vmem [#allocation3], %s257
        %p259 = pneg %p38
        %p260 = pneg %p35
        %s261 = sand.u32 %s51, 1
        %s262 = sand.u32 %s51, 1
        %s263 = smul.addr %s262, 32
        %s264 = scalar_lea.vmem [#allocation4], %s263
        %p265 = pneg %p64
        %p266 = pneg %p61
        %p267 = pneg %p85
        %p268 = pneg %p82
        %p269 = pneg %p111
        %p270 = pneg %p108
        %s271 = sand.u32 %s98, 1
        %s272 = scalar_lea.sflag [#allocation6], %s271
        %s273 = sand.u32 %s98, 1
        %s274 = smul.addr %s273, 8
        %s275 = scalar_lea.vmem [#allocation5], %s274
        %v276 = vld [vmem:[%s244] sm:$0xff]
        %s277 = scalar_lea.vmem %s244, 8 [#allocation3]
        %v278 = vld [vmem:[%s277] sm:$0xff]
        %v279 = vadd.f32 %v276, %v278
        %v280 = vld [vmem:[%s251] sm:$0xff]
        %v281 = vld [vmem:[%s251 + $0x8] sm:$0xff]
        %s282 = scalar_lea.vmem %s251, 16 [#allocation4]
        %v283 = vld [vmem:[%s282] sm:$0xff]
        %v284 = vld [vmem:[%s282 + $0x8] sm:$0xff]
        %v285 = vadd.f32 %v280, %v283
        %v286 = vadd.f32 %v281, %v284
        %v287 = vld [vmem:[%s2] sm:$0xff]
        %v288 = vld [vmem:[%s2 + $0x8] sm:$0xff]
        %v289 = vld [vmem:[%s2 + $0x10] sm:$0xff]
        %v290 = vld [vmem:[%s2 + $0x18] sm:$0xff]
        %v291 = vld [vmem:[%s2 + $0x20] sm:$0xff]
        %v292 = vld [vmem:[%s2 + $0x28] sm:$0xff]
        %v293 = vld [vmem:[%s2 + $0x30] sm:$0xff]
        %v294 = vld [vmem:[%s2 + $0x38] sm:$0xff]
        %v295 = vld [vmem:[%s2 + $0x40] sm:$0xff]
        %v296 = vld [vmem:[%s2 + $0x48] sm:$0xff]
        %v297 = vld [vmem:[%s2 + $0x50] sm:$0xff]
        %v298 = vld [vmem:[%s2 + $0x58] sm:$0xff]
        %v299 = vld [vmem:[%s2 + $0x60] sm:$0xff]
        %v300 = vld [vmem:[%s2 + $0x68] sm:$0xff]
        %v301 = vld [vmem:[%s2 + $0x70] sm:$0xff]
        %v302 = vld [vmem:[%s2 + $0x78] sm:$0xff]
        %v303 = vld [vmem:[%s2 + $0x80] sm:$0xff]
        %v304 = vld [vmem:[%s2 + $0x88] sm:$0xff]
        %v305 = vld [vmem:[%s2 + $0x90] sm:$0xff]
        %v306 = vld [vmem:[%s2 + $0x98] sm:$0xff]
        %v307 = vld [vmem:[%s2 + $0xa0] sm:$0xff]
        %v308 = vld [vmem:[%s2 + $0xa8] sm:$0xff]
        %v309 = vld [vmem:[%s2 + $0xb0] sm:$0xff]
        %v310 = vld [vmem:[%s2 + $0xb8] sm:$0xff]
        %v311 = vld [vmem:[%s2 + $0xc0] sm:$0xff]
        %v312 = vld [vmem:[%s2 + $0xc8] sm:$0xff]
        %v313 = vld [vmem:[%s2 + $0xd0] sm:$0xff]
        %v314 = vld [vmem:[%s2 + $0xd8] sm:$0xff]
        %v315 = vld [vmem:[%s2 + $0xe0] sm:$0x1]
        %v316 = vld [vmem:[%s2 + $0xe8] sm:$0x1]
        %v317 = vld [vmem:[%s2 + $0xf0] sm:$0x1]
        %v318 = vld [vmem:[%s2 + $0xf8] sm:$0x1]
        %v319 = vld [vmem:[%s2 + $0x100] sm:$0x1]
        %v320 = vld [vmem:[%s2 + $0x108] sm:$0x1]
        %v321 = vld [vmem:[%s2 + $0x110] sm:$0x1]
        %v322 = vld [vmem:[%s2 + $0x118] sm:$0x1]
        %v323 = vld [vmem:[%s2 + $0x120] sm:$0x1]
        %v324 = vld [vmem:[%s2 + $0x128] sm:$0x1]
        %v325 = vlaneseq
        %v326 = vshrl.u32 %v325, 7
        %v327 = vsub.s32 0, %v326
        %v328 = vrot.slane %v315, %v327
        %vm329 = vcmask 261120
        %v331 = vsel %vm329, %v279, 0
        %333 = vmatprep.subr.mxu0 0.0
        %334 = vmatpush1.msra.mxu0 0.0
        %335 = vmatprep.subr.mxu0 0.0
        %336 = vmatpush1.msra.mxu0 0.0
        %337 = vmatprep.subr.mxu0 0.0
        %338 = vmatpush1.msra.mxu0 0.0
        %339 = vmatprep.subr.mxu0 0.0
        %340 = vmatpush1.msra.mxu0 0.0
        %341 = vmatprep.subr.mxu0 0.0
        %342 = vmatpush1.msra.mxu0 0.0
        %343 = vmatprep.subr.mxu0 0.0
        %344 = vmatpush1.msra.mxu0 0.0
        %345 = vmatprep.subr.mxu0 0.0
        %346 = vmatpush1.msra.mxu0 0.0
        %347 = vmatprep.subr.mxu0 0.0
        %348 = vmatpush1.msra.mxu0 0.0
        %349 = vmatprep.subr.mxu0 0.0
        %350 = vmatpush1.msra.mxu0 0.0
        %351 = vmatprep.subr.mxu0 0.0
        %352 = vmatpush1.msra.mxu0 0.0
        %353 = vmatprep.subr.mxu0 0.0
        %354 = vmatpush1.msra.mxu0 0.0
        %355 = vmatprep.subr.mxu0 0.0
        %356 = vmatpush1.msra.mxu0 0.0
        %357 = vmatprep.subr.mxu0 0.0
        %358 = vmatpush1.msra.mxu0 %v290
        %359 = vmatprep.subr.mxu0 0.0
        %360 = vmatpush1.msra.mxu0 %v289
        %361 = vmatprep.subr.mxu0 0.0
        %362 = vmatpush1.msra.mxu0 %v288
        %363 = vmatprep.subr.mxu0 0.0
        %364 = vmatpush1.msra.mxu0 %v287
        %365 = vmatprep.subr.mxu0 0.0
        %366 = vmatpush2.msra.mxu0 0.0
        %367 = vmatprep.subr.mxu0 0.0
        %368 = vmatpush2.msra.mxu0 0.0
        %369 = vmatprep.subr.mxu0 0.0
        %370 = vmatpush2.msra.mxu0 0.0
        %371 = vmatprep.subr.mxu0 0.0
        %372 = vmatpush2.msra.mxu0 0.0
        %373 = vmatprep.subr.mxu0 0.0
        %374 = vmatpush2.msra.mxu0 0.0
        %375 = vmatprep.subr.mxu0 0.0
        %376 = vmatpush2.msra.mxu0 0.0
        %377 = vmatprep.subr.mxu0 0.0
        %378 = vmatpush2.msra.mxu0 0.0
        %379 = vmatprep.subr.mxu0 0.0
        %380 = vmatpush2.msra.mxu0 0.0
        %381 = vmatprep.subr.mxu0 0.0
        %382 = vmatpush2.msra.mxu0 0.0
        %383 = vmatprep.subr.mxu0 0.0
        %384 = vmatpush2.msra.mxu0 0.0
        %385 = vmatprep.subr.mxu0 0.0
        %386 = vmatpush2.msra.mxu0 0.0
        %387 = vmatprep.subr.mxu0 0.0
        %388 = vmatpush2.msra.mxu0 0.0
        %389 = vmatprep.subr.mxu0 0.0
        %390 = vmatpush2.msra.mxu0 0.0
        %391 = vmatprep.subr.mxu0 0.0
        %392 = vmatpush2.msra.mxu0 0.0
        %393 = vmatprep.subr.mxu0 0.0
        %394 = vmatpush2.msra.mxu0 0.0
        %395 = vmatprep.subr.mxu0 0.0
        %396 = vmatpush2.msra.mxu0 0.0
        %397 = vmatprep.mubr.f32.mxu0 0.0
        %398 = vmatmul.mubr.f32.gmra.mxu0 %v331
        %v399 = vpop.f32.mrf.mxu0
        %v400 = vadd.f32 %v328, %v399
        %v401 = vpop.f32.mrf.mxu0
        %402 = vdwg.mxu0
        %v403 = vlaneseq
        %v404 = vshrl.u32 %v403, 7
        %v405 = vsub.s32 0, %v404
        %v406 = vrot.slane %v316, %v405
        %v408 = vsel %vm329, %v285, 0
        %v411 = vsel %vm329, %v286, 0
        %413 = vmatprep.subr.mxu0 0.0
        %414 = vmatpush1.msra.mxu0 0.0
        %415 = vmatprep.subr.mxu0 0.0
        %416 = vmatpush1.msra.mxu0 0.0
        %417 = vmatprep.subr.mxu0 0.0
        %418 = vmatpush1.msra.mxu0 0.0
        %419 = vmatprep.subr.mxu0 0.0
        %420 = vmatpush1.msra.mxu0 0.0
        %421 = vmatprep.subr.mxu0 0.0
        %422 = vmatpush1.msra.mxu0 0.0
        %423 = vmatprep.subr.mxu0 0.0
        %424 = vmatpush1.msra.mxu0 0.0
        %425 = vmatprep.subr.mxu0 0.0
        %426 = vmatpush1.msra.mxu0 0.0
        %427 = vmatprep.subr.mxu0 0.0
        %428 = vmatpush1.msra.mxu0 0.0
        %429 = vmatprep.subr.mxu0 0.0
        %430 = vmatpush1.msra.mxu0 0.0
        %431 = vmatprep.subr.mxu0 0.0
        %432 = vmatpush1.msra.mxu0 0.0
        %433 = vmatprep.subr.mxu0 0.0
        %434 = vmatpush1.msra.mxu0 0.0
        %435 = vmatprep.subr.mxu0 0.0
        %436 = vmatpush1.msra.mxu0 0.0
        %437 = vmatprep.subr.mxu0 0.0
        %438 = vmatpush1.msra.mxu0 %v294
        %439 = vmatprep.subr.mxu0 0.0
        %440 = vmatpush1.msra.mxu0 %v293
        %441 = vmatprep.subr.mxu0 0.0
        %442 = vmatpush1.msra.mxu0 %v292
        %443 = vmatprep.subr.mxu0 0.0
        %444 = vmatpush1.msra.mxu0 %v291
        %445 = vmatprep.subr.mxu0 0.0
        %446 = vmatpush2.msra.mxu0 0.0
        %447 = vmatprep.subr.mxu0 0.0
        %448 = vmatpush2.msra.mxu0 0.0
        %449 = vmatprep.subr.mxu0 0.0
        %450 = vmatpush2.msra.mxu0 0.0
        %451 = vmatprep.subr.mxu0 0.0
        %452 = vmatpush2.msra.mxu0 0.0
        %453 = vmatprep.subr.mxu0 0.0
        %454 = vmatpush2.msra.mxu0 0.0
        %455 = vmatprep.subr.mxu0 0.0
        %456 = vmatpush2.msra.mxu0 0.0
        %457 = vmatprep.subr.mxu0 0.0
        %458 = vmatpush2.msra.mxu0 0.0
        %459 = vmatprep.subr.mxu0 0.0
        %460 = vmatpush2.msra.mxu0 0.0
        %461 = vmatprep.subr.mxu0 0.0
        %462 = vmatpush2.msra.mxu0 0.0
        %463 = vmatprep.subr.mxu0 0.0
        %464 = vmatpush2.msra.mxu0 0.0
        %465 = vmatprep.subr.mxu0 0.0
        %466 = vmatpush2.msra.mxu0 0.0
        %467 = vmatprep.subr.mxu0 0.0
        %468 = vmatpush2.msra.mxu0 0.0
        %469 = vmatprep.subr.mxu0 0.0
        %470 = vmatpush2.msra.mxu0 0.0
        %471 = vmatprep.subr.mxu0 0.0
        %472 = vmatpush2.msra.mxu0 0.0
        %473 = vmatprep.subr.mxu0 0.0
        %474 = vmatpush2.msra.mxu0 0.0
        %475 = vmatprep.subr.mxu0 0.0
        %476 = vmatpush2.msra.mxu0 0.0
        %477 = vmatprep.mubr.f32.mxu0 0.0
        %478 = vmatmul.mubr.f32.gmra.mxu0 %v408
        %v479 = vpop.f32.mrf.mxu0
        %v480 = vadd.f32 %v406, %v479
        %v481 = vpop.f32.mrf.mxu0
        %482 = vmatprep.mubr.f32.mxu0 0.0
        %483 = vmatmul.mubr.f32.gmra.mxu0 %v411
        %v484 = vpop.f32.mrf.mxu0
        %v485 = vadd.f32 %v406, %v484
        %v486 = vpop.f32.mrf.mxu0
        %487 = vdwg.mxu0
        %v488 = vlaneseq
        %v489 = vshrl.u32 %v488, 7
        %v490 = vsub.s32 0, %v489
        %v491 = vrot.slane %v317, %v490
        %v493 = vsel %vm329, %v280, 0
        %v496 = vsel %vm329, %v281, 0
        %498 = vmatprep.subr.mxu0 0.0
        %499 = vmatpush1.msra.mxu0 0.0
        %500 = vmatprep.subr.mxu0 0.0
        %501 = vmatpush1.msra.mxu0 0.0
        %502 = vmatprep.subr.mxu0 0.0
        %503 = vmatpush1.msra.mxu0 0.0
        %504 = vmatprep.subr.mxu0 0.0
        %505 = vmatpush1.msra.mxu0 0.0
        %506 = vmatprep.subr.mxu0 0.0
        %507 = vmatpush1.msra.mxu0 0.0
        %508 = vmatprep.subr.mxu0 0.0
        %509 = vmatpush1.msra.mxu0 0.0
        %510 = vmatprep.subr.mxu0 0.0
        %511 = vmatpush1.msra.mxu0 0.0
        %512 = vmatprep.subr.mxu0 0.0
        %513 = vmatpush1.msra.mxu0 0.0
        %514 = vmatprep.subr.mxu0 0.0
        %515 = vmatpush1.msra.mxu0 0.0
        %516 = vmatprep.subr.mxu0 0.0
        %517 = vmatpush1.msra.mxu0 0.0
        %518 = vmatprep.subr.mxu0 0.0
        %519 = vmatpush1.msra.mxu0 0.0
        %520 = vmatprep.subr.mxu0 0.0
        %521 = vmatpush1.msra.mxu0 0.0
        %522 = vmatprep.subr.mxu0 0.0
        %523 = vmatpush1.msra.mxu0 %v298
        %524 = vmatprep.subr.mxu0 0.0
        %525 = vmatpush1.msra.mxu0 %v297
        %526 = vmatprep.subr.mxu0 0.0
        %527 = vmatpush1.msra.mxu0 %v296
        %528 = vmatprep.subr.mxu0 0.0
        %529 = vmatpush1.msra.mxu0 %v295
        %530 = vmatprep.subr.mxu0 0.0
        %531 = vmatpush2.msra.mxu0 0.0
        %532 = vmatprep.subr.mxu0 0.0
        %533 = vmatpush2.msra.mxu0 0.0
        %534 = vmatprep.subr.mxu0 0.0
        %535 = vmatpush2.msra.mxu0 0.0
        %536 = vmatprep.subr.mxu0 0.0
        %537 = vmatpush2.msra.mxu0 0.0
        %538 = vmatprep.subr.mxu0 0.0
        %539 = vmatpush2.msra.mxu0 0.0
        %540 = vmatprep.subr.mxu0 0.0
        %541 = vmatpush2.msra.mxu0 0.0
        %542 = vmatprep.subr.mxu0 0.0
        %543 = vmatpush2.msra.mxu0 0.0
        %544 = vmatprep.subr.mxu0 0.0
        %545 = vmatpush2.msra.mxu0 0.0
        %546 = vmatprep.subr.mxu0 0.0
        %547 = vmatpush2.msra.mxu0 0.0
        %548 = vmatprep.subr.mxu0 0.0
        %549 = vmatpush2.msra.mxu0 0.0
        %550 = vmatprep.subr.mxu0 0.0
        %551 = vmatpush2.msra.mxu0 0.0
        %552 = vmatprep.subr.mxu0 0.0
        %553 = vmatpush2.msra.mxu0 0.0
        %554 = vmatprep.subr.mxu0 0.0
        %555 = vmatpush2.msra.mxu0 0.0
        %556 = vmatprep.subr.mxu0 0.0
        %557 = vmatpush2.msra.mxu0 0.0
        %558 = vmatprep.subr.mxu0 0.0
        %559 = vmatpush2.msra.mxu0 0.0
        %560 = vmatprep.subr.mxu0 0.0
        %561 = vmatpush2.msra.mxu0 0.0
        %562 = vmatprep.mubr.f32.mxu0 0.0
        %563 = vmatmul.mubr.f32.gmra.mxu0 %v493
        %v564 = vpop.f32.mrf.mxu0
        %v565 = vadd.f32 %v491, %v564
        %v566 = vpop.f32.mrf.mxu0
        %567 = vmatprep.mubr.f32.mxu0 0.0
        %568 = vmatmul.mubr.f32.gmra.mxu0 %v496
        %v569 = vpop.f32.mrf.mxu0
        %v570 = vadd.f32 %v491, %v569
        %v571 = vpop.f32.mrf.mxu0
        %572 = vdwg.mxu0
        %vm573 = vcmask 64512
        %v575 = vsel %vm573, %v400, 0
        %v578 = vsel %vm573, %v480, 0
        %v581 = vsel %vm573, %v485, 0
        %583 = vmatprep.subr.mxu0 0.0
        %584 = vmatpush1.xpose.msra.mxu0 0.0
        %585 = vmatprep.subr.mxu0 0.0
        %586 = vmatpush1.xpose.msra.mxu0 0.0
        %587 = vmatprep.subr.mxu0 0.0
        %588 = vmatpush1.xpose.msra.mxu0 0.0
        %589 = vmatprep.subr.mxu0 0.0
        %590 = vmatpush1.xpose.msra.mxu0 0.0
        %591 = vmatprep.subr.mxu0 0.0
        %592 = vmatpush1.xpose.msra.mxu0 0.0
        %593 = vmatprep.subr.mxu0 0.0
        %594 = vmatpush1.xpose.msra.mxu0 0.0
        %595 = vmatprep.subr.mxu0 0.0
        %596 = vmatpush1.xpose.msra.mxu0 0.0
        %597 = vmatprep.subr.mxu0 0.0
        %598 = vmatpush1.xpose.msra.mxu0 0.0
        %599 = vmatprep.subr.mxu0 0.0
        %600 = vmatpush1.xpose.msra.mxu0 0.0
        %601 = vmatprep.subr.mxu0 0.0
        %602 = vmatpush1.xpose.msra.mxu0 0.0
        %603 = vmatprep.subr.mxu0 0.0
        %604 = vmatpush1.xpose.msra.mxu0 0.0
        %605 = vmatprep.subr.mxu0 0.0
        %606 = vmatpush1.xpose.msra.mxu0 0.0
        %607 = vmatprep.subr.mxu0 0.0
        %608 = vmatpush1.xpose.msra.mxu0 0.0
        %609 = vmatprep.subr.mxu0 0.0
        %610 = vmatpush1.xpose.msra.mxu0 0.0
        %611 = vmatprep.subr.mxu0 0.0
        %612 = vmatpush1.xpose.msra.mxu0 %v581
        %613 = vmatprep.subr.mxu0 0.0
        %614 = vmatpush1.xpose.msra.mxu0 %v578
        %615 = vmatprep.subr.mxu0 0.0
        %616 = vmatpush2.xpose.msra.mxu0 0.0
        %617 = vmatprep.subr.mxu0 0.0
        %618 = vmatpush2.xpose.msra.mxu0 0.0
        %619 = vmatprep.subr.mxu0 0.0
        %620 = vmatpush2.xpose.msra.mxu0 0.0
        %621 = vmatprep.subr.mxu0 0.0
        %622 = vmatpush2.xpose.msra.mxu0 0.0
        %623 = vmatprep.subr.mxu0 0.0
        %624 = vmatpush2.xpose.msra.mxu0 0.0
        %625 = vmatprep.subr.mxu0 0.0
        %626 = vmatpush2.xpose.msra.mxu0 0.0
        %627 = vmatprep.subr.mxu0 0.0
        %628 = vmatpush2.xpose.msra.mxu0 0.0
        %629 = vmatprep.subr.mxu0 0.0
        %630 = vmatpush2.xpose.msra.mxu0 0.0
        %631 = vmatprep.subr.mxu0 0.0
        %632 = vmatpush2.xpose.msra.mxu0 0.0
        %633 = vmatprep.subr.mxu0 0.0
        %634 = vmatpush2.xpose.msra.mxu0 0.0
        %635 = vmatprep.subr.mxu0 0.0
        %636 = vmatpush2.xpose.msra.mxu0 0.0
        %637 = vmatprep.subr.mxu0 0.0
        %638 = vmatpush2.xpose.msra.mxu0 0.0
        %639 = vmatprep.subr.mxu0 0.0
        %640 = vmatpush2.xpose.msra.mxu0 0.0
        %641 = vmatprep.subr.mxu0 0.0
        %642 = vmatpush2.xpose.msra.mxu0 0.0
        %643 = vmatprep.subr.mxu0 0.0
        %644 = vmatpush2.xpose.msra.mxu0 0.0
        %645 = vmatprep.subr.mxu0 0.0
        %646 = vmatpush2.xpose.msra.mxu0 0.0
        %647 = vmatprep.mubr.f32.mxu0 0.0
        %648 = vmatmul.mubr.f32.gmra.mxu0 %v575
        %v649 = vpop.f32.mrf.mxu0
        %v650 = vadd.f32 0.0, %v649
        %v651 = vpop.f32.mrf.mxu0
        %652 = vdwg.mxu0
        %vm653 = vcmask 130048
        %v654 = vsel %vm653, %v650, -inf
        %655 = vmax.xlane.f32.xlu0 %v654
        %v656 = vpop.xlane.xlu0 %655
        %v657 = vsub.f32 %v650, %v656
        %v658 = vmul.f32 %v657, 1.442695
        %v659 = vpow.pop %v658
        %v660 = vsel %vm653, %v659, 0.0
        %661 = vadd.xlane.f32.xlu0 %v660
        %v662 = vpop.xlane.xlu0 %661
        %v663 = vrcp.pop %v662
        %v664 = vmul.f32 %v659, %v663
        %v666 = vsel %vm653, %v664, 0
        %668 = vmatprep.subr.mxu0 0.0
        %669 = vmatpush1.msra.mxu0 0.0
        %670 = vmatprep.subr.mxu0 0.0
        %671 = vmatpush1.msra.mxu0 0.0
        %672 = vmatprep.subr.mxu0 0.0
        %673 = vmatpush1.msra.mxu0 0.0
        %674 = vmatprep.subr.mxu0 0.0
        %675 = vmatpush1.msra.mxu0 0.0
        %676 = vmatprep.subr.mxu0 0.0
        %677 = vmatpush1.msra.mxu0 0.0
        %678 = vmatprep.subr.mxu0 0.0
        %679 = vmatpush1.msra.mxu0 0.0
        %680 = vmatprep.subr.mxu0 0.0
        %681 = vmatpush1.msra.mxu0 0.0
        %682 = vmatprep.subr.mxu0 0.0
        %683 = vmatpush1.msra.mxu0 0.0
        %684 = vmatprep.subr.mxu0 0.0
        %685 = vmatpush1.msra.mxu0 0.0
        %686 = vmatprep.subr.mxu0 0.0
        %687 = vmatpush1.msra.mxu0 0.0
        %688 = vmatprep.subr.mxu0 0.0
        %689 = vmatpush1.msra.mxu0 0.0
        %690 = vmatprep.subr.mxu0 0.0
        %691 = vmatpush1.msra.mxu0 0.0
        %692 = vmatprep.subr.mxu0 0.0
        %693 = vmatpush1.msra.mxu0 0.0
        %694 = vmatprep.subr.mxu0 0.0
        %695 = vmatpush1.msra.mxu0 0.0
        %696 = vmatprep.subr.mxu0 0.0
        %697 = vmatpush1.msra.mxu0 %v570
        %698 = vmatprep.subr.mxu0 0.0
        %699 = vmatpush1.msra.mxu0 %v565
        %700 = vmatprep.subr.mxu0 0.0
        %701 = vmatpush2.msra.mxu0 0.0
        %702 = vmatprep.subr.mxu0 0.0
        %703 = vmatpush2.msra.mxu0 0.0
        %704 = vmatprep.subr.mxu0 0.0
        %705 = vmatpush2.msra.mxu0 0.0
        %706 = vmatprep.subr.mxu0 0.0
        %707 = vmatpush2.msra.mxu0 0.0
        %708 = vmatprep.subr.mxu0 0.0
        %709 = vmatpush2.msra.mxu0 0.0
        %710 = vmatprep.subr.mxu0 0.0
        %711 = vmatpush2.msra.mxu0 0.0
        %712 = vmatprep.subr.mxu0 0.0
        %713 = vmatpush2.msra.mxu0 0.0
        %714 = vmatprep.subr.mxu0 0.0
        %715 = vmatpush2.msra.mxu0 0.0
        %716 = vmatprep.subr.mxu0 0.0
        %717 = vmatpush2.msra.mxu0 0.0
        %718 = vmatprep.subr.mxu0 0.0
        %719 = vmatpush2.msra.mxu0 0.0
        %720 = vmatprep.subr.mxu0 0.0
        %721 = vmatpush2.msra.mxu0 0.0
        %722 = vmatprep.subr.mxu0 0.0
        %723 = vmatpush2.msra.mxu0 0.0
        %724 = vmatprep.subr.mxu0 0.0
        %725 = vmatpush2.msra.mxu0 0.0
        %726 = vmatprep.subr.mxu0 0.0
        %727 = vmatpush2.msra.mxu0 0.0
        %728 = vmatprep.subr.mxu0 0.0
        %729 = vmatpush2.msra.mxu0 0.0
        %730 = vmatprep.subr.mxu0 0.0
        %731 = vmatpush2.msra.mxu0 0.0
        %732 = vmatprep.mubr.f32.mxu0 0.0
        %733 = vmatmul.mubr.f32.gmra.mxu0 %v666
        %v734 = vpop.f32.mrf.mxu0
        %v735 = vadd.f32 0.0, %v734
        %v736 = vpop.f32.mrf.mxu0
        %737 = vdwg.mxu0
        %738 = vst.msk [vmem:[#allocation2] sm:$0xff] %vm573, %v735
        %739 = vrot.lane.b32.xlu0 %v400, 120
        %v740 = vpop.permute.xlu0 %739
        %741 = vrot.lane.b32.xlu0 %v480, 120
        %v742 = vpop.permute.xlu0 %741
        %743 = vrot.lane.b32.xlu0 %v485, 120
        %v744 = vpop.permute.xlu0 %743
        %v745 = vsel %vm573, %v740, 0
        %v747 = vsel %vm573, %v742, 0
        %v749 = vsel %vm573, %v744, 0
        %751 = vmatprep.subr.mxu0 0.0
        %752 = vmatpush1.xpose.msra.mxu0 0.0
        %753 = vmatprep.subr.mxu0 0.0
        %754 = vmatpush1.xpose.msra.mxu0 0.0
        %755 = vmatprep.subr.mxu0 0.0
        %756 = vmatpush1.xpose.msra.mxu0 0.0
        %757 = vmatprep.subr.mxu0 0.0
        %758 = vmatpush1.xpose.msra.mxu0 0.0
        %759 = vmatprep.subr.mxu0 0.0
        %760 = vmatpush1.xpose.msra.mxu0 0.0
        %761 = vmatprep.subr.mxu0 0.0
        %762 = vmatpush1.xpose.msra.mxu0 0.0
        %763 = vmatprep.subr.mxu0 0.0
        %764 = vmatpush1.xpose.msra.mxu0 0.0
        %765 = vmatprep.subr.mxu0 0.0
        %766 = vmatpush1.xpose.msra.mxu0 0.0
        %767 = vmatprep.subr.mxu0 0.0
        %768 = vmatpush1.xpose.msra.mxu0 0.0
        %769 = vmatprep.subr.mxu0 0.0
        %770 = vmatpush1.xpose.msra.mxu0 0.0
        %771 = vmatprep.subr.mxu0 0.0
        %772 = vmatpush1.xpose.msra.mxu0 0.0
        %773 = vmatprep.subr.mxu0 0.0
        %774 = vmatpush1.xpose.msra.mxu0 0.0
        %775 = vmatprep.subr.mxu0 0.0
        %776 = vmatpush1.xpose.msra.mxu0 0.0
        %777 = vmatprep.subr.mxu0 0.0
        %778 = vmatpush1.xpose.msra.mxu0 0.0
        %779 = vmatprep.subr.mxu0 0.0
        %780 = vmatpush1.xpose.msra.mxu0 %v749
        %781 = vmatprep.subr.mxu0 0.0
        %782 = vmatpush1.xpose.msra.mxu0 %v747
        %783 = vmatprep.subr.mxu0 0.0
        %784 = vmatpush2.xpose.msra.mxu0 0.0
        %785 = vmatprep.subr.mxu0 0.0
        %786 = vmatpush2.xpose.msra.mxu0 0.0
        %787 = vmatprep.subr.mxu0 0.0
        %788 = vmatpush2.xpose.msra.mxu0 0.0
        %789 = vmatprep.subr.mxu0 0.0
        %790 = vmatpush2.xpose.msra.mxu0 0.0
        %791 = vmatprep.subr.mxu0 0.0
        %792 = vmatpush2.xpose.msra.mxu0 0.0
        %793 = vmatprep.subr.mxu0 0.0
        %794 = vmatpush2.xpose.msra.mxu0 0.0
        %795 = vmatprep.subr.mxu0 0.0
        %796 = vmatpush2.xpose.msra.mxu0 0.0
        %797 = vmatprep.subr.mxu0 0.0
        %798 = vmatpush2.xpose.msra.mxu0 0.0
        %799 = vmatprep.subr.mxu0 0.0
        %800 = vmatpush2.xpose.msra.mxu0 0.0
        %801 = vmatprep.subr.mxu0 0.0
        %802 = vmatpush2.xpose.msra.mxu0 0.0
        %803 = vmatprep.subr.mxu0 0.0
        %804 = vmatpush2.xpose.msra.mxu0 0.0
        %805 = vmatprep.subr.mxu0 0.0
        %806 = vmatpush2.xpose.msra.mxu0 0.0
        %807 = vmatprep.subr.mxu0 0.0
        %808 = vmatpush2.xpose.msra.mxu0 0.0
        %809 = vmatprep.subr.mxu0 0.0
        %810 = vmatpush2.xpose.msra.mxu0 0.0
        %811 = vmatprep.subr.mxu0 0.0
        %812 = vmatpush2.xpose.msra.mxu0 0.0
        %813 = vmatprep.subr.mxu0 0.0
        %814 = vmatpush2.xpose.msra.mxu0 0.0
        %815 = vmatprep.mubr.f32.mxu0 0.0
        %816 = vmatmul.mubr.f32.gmra.mxu0 %v745
        %v817 = vpop.f32.mrf.mxu0
        %v818 = vadd.f32 0.0, %v817
        %v819 = vpop.f32.mrf.mxu0
        %820 = vdwg.mxu0
        %v821 = vsel %vm653, %v818, -inf
        %822 = vmax.xlane.f32.xlu0 %v821
        %v823 = vpop.xlane.xlu0 %822
        %v824 = vsub.f32 %v818, %v823
        %v825 = vmul.f32 %v824, 1.442695
        %v826 = vpow.pop %v825
        %v827 = vsel %vm653, %v826, 0.0
        %828 = vadd.xlane.f32.xlu0 %v827
        %v829 = vpop.xlane.xlu0 %828
        %v830 = vrcp.pop %v829
        %v831 = vmul.f32 %v826, %v830
        %834 = vrot.lane.b32.xlu0 %v565, 120
        %v835 = vpop.permute.xlu0 %834
        %836 = vrot.lane.b32.xlu0 %v570, 120
        %v837 = vpop.permute.xlu0 %836
        %v841 = vsel %vm653, %v831, 0
        %843 = vmatprep.subr.mxu0 0.0
        %844 = vmatpush1.msra.mxu0 0.0
        %845 = vmatprep.subr.mxu0 0.0
        %846 = vmatpush1.msra.mxu0 0.0
        %847 = vmatprep.subr.mxu0 0.0
        %848 = vmatpush1.msra.mxu0 0.0
        %849 = vmatprep.subr.mxu0 0.0
        %850 = vmatpush1.msra.mxu0 0.0
        %851 = vmatprep.subr.mxu0 0.0
        %852 = vmatpush1.msra.mxu0 0.0
        %853 = vmatprep.subr.mxu0 0.0
        %854 = vmatpush1.msra.mxu0 0.0
        %855 = vmatprep.subr.mxu0 0.0
        %856 = vmatpush1.msra.mxu0 0.0
        %857 = vmatprep.subr.mxu0 0.0
        %858 = vmatpush1.msra.mxu0 0.0
        %859 = vmatprep.subr.mxu0 0.0
        %860 = vmatpush1.msra.mxu0 0.0
        %861 = vmatprep.subr.mxu0 0.0
        %862 = vmatpush1.msra.mxu0 0.0
        %863 = vmatprep.subr.mxu0 0.0
        %864 = vmatpush1.msra.mxu0 0.0
        %865 = vmatprep.subr.mxu0 0.0
        %866 = vmatpush1.msra.mxu0 0.0
        %867 = vmatprep.subr.mxu0 0.0
        %868 = vmatpush1.msra.mxu0 0.0
        %869 = vmatprep.subr.mxu0 0.0
        %870 = vmatpush1.msra.mxu0 0.0
        %871 = vmatprep.subr.mxu0 0.0
        %872 = vmatpush1.msra.mxu0 %v837
        %873 = vmatprep.subr.mxu0 0.0
        %874 = vmatpush1.msra.mxu0 %v835
        %875 = vmatprep.subr.mxu0 0.0
        %876 = vmatpush2.msra.mxu0 0.0
        %877 = vmatprep.subr.mxu0 0.0
        %878 = vmatpush2.msra.mxu0 0.0
        %879 = vmatprep.subr.mxu0 0.0
        %880 = vmatpush2.msra.mxu0 0.0
        %881 = vmatprep.subr.mxu0 0.0
        %882 = vmatpush2.msra.mxu0 0.0
        %883 = vmatprep.subr.mxu0 0.0
        %884 = vmatpush2.msra.mxu0 0.0
        %885 = vmatprep.subr.mxu0 0.0
        %886 = vmatpush2.msra.mxu0 0.0
        %887 = vmatprep.subr.mxu0 0.0
        %888 = vmatpush2.msra.mxu0 0.0
        %889 = vmatprep.subr.mxu0 0.0
        %890 = vmatpush2.msra.mxu0 0.0
        %891 = vmatprep.subr.mxu0 0.0
        %892 = vmatpush2.msra.mxu0 0.0
        %893 = vmatprep.subr.mxu0 0.0
        %894 = vmatpush2.msra.mxu0 0.0
        %895 = vmatprep.subr.mxu0 0.0
        %896 = vmatpush2.msra.mxu0 0.0
        %897 = vmatprep.subr.mxu0 0.0
        %898 = vmatpush2.msra.mxu0 0.0
        %899 = vmatprep.subr.mxu0 0.0
        %900 = vmatpush2.msra.mxu0 0.0
        %901 = vmatprep.subr.mxu0 0.0
        %902 = vmatpush2.msra.mxu0 0.0
        %903 = vmatprep.subr.mxu0 0.0
        %904 = vmatpush2.msra.mxu0 0.0
        %905 = vmatprep.subr.mxu0 0.0
        %906 = vmatpush2.msra.mxu0 0.0
        %907 = vmatprep.mubr.f32.mxu0 0.0
        %908 = vmatmul.mubr.f32.gmra.mxu0 %v841
        %v909 = vpop.f32.mrf.mxu0
        %v910 = vadd.f32 0.0, %v909
        %v911 = vpop.f32.mrf.mxu0
        %912 = vdwg.mxu0
        %914 = vrot.lane.b32.xlu0 %v910, 8
        %v915 = vpop.permute.xlu0 %914
        %vm917 = vcmask 130112
        %918 = vst.msk [vmem:[#allocation2] sm:$0xff] %vm917, %v915
        %919 = vrot.lane.b32.xlu0 %v400, 112
        %v920 = vpop.permute.xlu0 %919
        %921 = vrot.lane.b32.xlu0 %v480, 112
        %v922 = vpop.permute.xlu0 %921
        %923 = vrot.lane.b32.xlu0 %v485, 112
        %v924 = vpop.permute.xlu0 %923
        %v925 = vsel %vm573, %v920, 0
        %v927 = vsel %vm573, %v922, 0
        %v929 = vsel %vm573, %v924, 0
        %931 = vmatprep.subr.mxu0 0.0
        %932 = vmatpush1.xpose.msra.mxu0 0.0
        %933 = vmatprep.subr.mxu0 0.0
        %934 = vmatpush1.xpose.msra.mxu0 0.0
        %935 = vmatprep.subr.mxu0 0.0
        %936 = vmatpush1.xpose.msra.mxu0 0.0
        %937 = vmatprep.subr.mxu0 0.0
        %938 = vmatpush1.xpose.msra.mxu0 0.0
        %939 = vmatprep.subr.mxu0 0.0
        %940 = vmatpush1.xpose.msra.mxu0 0.0
        %941 = vmatprep.subr.mxu0 0.0
        %942 = vmatpush1.xpose.msra.mxu0 0.0
        %943 = vmatprep.subr.mxu0 0.0
        %944 = vmatpush1.xpose.msra.mxu0 0.0
        %945 = vmatprep.subr.mxu0 0.0
        %946 = vmatpush1.xpose.msra.mxu0 0.0
        %947 = vmatprep.subr.mxu0 0.0
        %948 = vmatpush1.xpose.msra.mxu0 0.0
        %949 = vmatprep.subr.mxu0 0.0
        %950 = vmatpush1.xpose.msra.mxu0 0.0
        %951 = vmatprep.subr.mxu0 0.0
        %952 = vmatpush1.xpose.msra.mxu0 0.0
        %953 = vmatprep.subr.mxu0 0.0
        %954 = vmatpush1.xpose.msra.mxu0 0.0
        %955 = vmatprep.subr.mxu0 0.0
        %956 = vmatpush1.xpose.msra.mxu0 0.0
        %957 = vmatprep.subr.mxu0 0.0
        %958 = vmatpush1.xpose.msra.mxu0 0.0
        %959 = vmatprep.subr.mxu0 0.0
        %960 = vmatpush1.xpose.msra.mxu0 %v929
        %961 = vmatprep.subr.mxu0 0.0
        %962 = vmatpush1.xpose.msra.mxu0 %v927
        %963 = vmatprep.subr.mxu0 0.0
        %964 = vmatpush2.xpose.msra.mxu0 0.0
        %965 = vmatprep.subr.mxu0 0.0
        %966 = vmatpush2.xpose.msra.mxu0 0.0
        %967 = vmatprep.subr.mxu0 0.0
        %968 = vmatpush2.xpose.msra.mxu0 0.0
        %969 = vmatprep.subr.mxu0 0.0
        %970 = vmatpush2.xpose.msra.mxu0 0.0
        %971 = vmatprep.subr.mxu0 0.0
        %972 = vmatpush2.xpose.msra.mxu0 0.0
        %973 = vmatprep.subr.mxu0 0.0
        %974 = vmatpush2.xpose.msra.mxu0 0.0
        %975 = vmatprep.subr.mxu0 0.0
        %976 = vmatpush2.xpose.msra.mxu0 0.0
        %977 = vmatprep.subr.mxu0 0.0
        %978 = vmatpush2.xpose.msra.mxu0 0.0
        %979 = vmatprep.subr.mxu0 0.0
        %980 = vmatpush2.xpose.msra.mxu0 0.0
        %981 = vmatprep.subr.mxu0 0.0
        %982 = vmatpush2.xpose.msra.mxu0 0.0
        %983 = vmatprep.subr.mxu0 0.0
        %984 = vmatpush2.xpose.msra.mxu0 0.0
        %985 = vmatprep.subr.mxu0 0.0
        %986 = vmatpush2.xpose.msra.mxu0 0.0
        %987 = vmatprep.subr.mxu0 0.0
        %988 = vmatpush2.xpose.msra.mxu0 0.0
        %989 = vmatprep.subr.mxu0 0.0
        %990 = vmatpush2.xpose.msra.mxu0 0.0
        %991 = vmatprep.subr.mxu0 0.0
        %992 = vmatpush2.xpose.msra.mxu0 0.0
        %993 = vmatprep.subr.mxu0 0.0
        %994 = vmatpush2.xpose.msra.mxu0 0.0
        %995 = vmatprep.mubr.f32.mxu0 0.0
        %996 = vmatmul.mubr.f32.gmra.mxu0 %v925
        %v997 = vpop.f32.mrf.mxu0
        %v998 = vadd.f32 0.0, %v997
        %v999 = vpop.f32.mrf.mxu0
        %1000 = vdwg.mxu0
        %v1001 = vsel %vm653, %v998, -inf
        %1002 = vmax.xlane.f32.xlu0 %v1001
        %v1003 = vpop.xlane.xlu0 %1002
        %v1004 = vsub.f32 %v998, %v1003
        %v1005 = vmul.f32 %v1004, 1.442695
        %v1006 = vpow.pop %v1005
        %v1007 = vsel %vm653, %v1006, 0.0
        %1008 = vadd.xlane.f32.xlu0 %v1007
        %v1009 = vpop.xlane.xlu0 %1008
        %v1010 = vrcp.pop %v1009
        %v1011 = vmul.f32 %v1006, %v1010
        %1012 = vrot.lane.b32.xlu0 %v565, 112
        %v1013 = vpop.permute.xlu0 %1012
        %1014 = vrot.lane.b32.xlu0 %v570, 112
        %v1015 = vpop.permute.xlu0 %1014
        %v1019 = vsel %vm653, %v1011, 0
        %1021 = vmatprep.subr.mxu0 0.0
        %1022 = vmatpush1.msra.mxu0 0.0
        %1023 = vmatprep.subr.mxu0 0.0
        %1024 = vmatpush1.msra.mxu0 0.0
        %1025 = vmatprep.subr.mxu0 0.0
        %1026 = vmatpush1.msra.mxu0 0.0
        %1027 = vmatprep.subr.mxu0 0.0
        %1028 = vmatpush1.msra.mxu0 0.0
        %1029 = vmatprep.subr.mxu0 0.0
        %1030 = vmatpush1.msra.mxu0 0.0
        %1031 = vmatprep.subr.mxu0 0.0
        %1032 = vmatpush1.msra.mxu0 0.0
        %1033 = vmatprep.subr.mxu0 0.0
        %1034 = vmatpush1.msra.mxu0 0.0
        %1035 = vmatprep.subr.mxu0 0.0
        %1036 = vmatpush1.msra.mxu0 0.0
        %1037 = vmatprep.subr.mxu0 0.0
        %1038 = vmatpush1.msra.mxu0 0.0
        %1039 = vmatprep.subr.mxu0 0.0
        %1040 = vmatpush1.msra.mxu0 0.0
        %1041 = vmatprep.subr.mxu0 0.0
        %1042 = vmatpush1.msra.mxu0 0.0
        %1043 = vmatprep.subr.mxu0 0.0
        %1044 = vmatpush1.msra.mxu0 0.0
        %1045 = vmatprep.subr.mxu0 0.0
        %1046 = vmatpush1.msra.mxu0 0.0
        %1047 = vmatprep.subr.mxu0 0.0
        %1048 = vmatpush1.msra.mxu0 0.0
        %1049 = vmatprep.subr.mxu0 0.0
        %1050 = vmatpush1.msra.mxu0 %v1015
        %1051 = vmatprep.subr.mxu0 0.0
        %1052 = vmatpush1.msra.mxu0 %v1013
        %1053 = vmatprep.subr.mxu0 0.0
        %1054 = vmatpush2.msra.mxu0 0.0
        %1055 = vmatprep.subr.mxu0 0.0
        %1056 = vmatpush2.msra.mxu0 0.0
        %1057 = vmatprep.subr.mxu0 0.0
        %1058 = vmatpush2.msra.mxu0 0.0
        %1059 = vmatprep.subr.mxu0 0.0
        %1060 = vmatpush2.msra.mxu0 0.0
        %1061 = vmatprep.subr.mxu0 0.0
        %1062 = vmatpush2.msra.mxu0 0.0
        %1063 = vmatprep.subr.mxu0 0.0
        %1064 = vmatpush2.msra.mxu0 0.0
        %1065 = vmatprep.subr.mxu0 0.0
        %1066 = vmatpush2.msra.mxu0 0.0
        %1067 = vmatprep.subr.mxu0 0.0
        %1068 = vmatpush2.msra.mxu0 0.0
        %1069 = vmatprep.subr.mxu0 0.0
        %1070 = vmatpush2.msra.mxu0 0.0
        %1071 = vmatprep.subr.mxu0 0.0
        %1072 = vmatpush2.msra.mxu0 0.0
        %1073 = vmatprep.subr.mxu0 0.0
        %1074 = vmatpush2.msra.mxu0 0.0
        %1075 = vmatprep.subr.mxu0 0.0
        %1076 = vmatpush2.msra.mxu0 0.0
        %1077 = vmatprep.subr.mxu0 0.0
        %1078 = vmatpush2.msra.mxu0 0.0
        %1079 = vmatprep.subr.mxu0 0.0
        %1080 = vmatpush2.msra.mxu0 0.0
        %1081 = vmatprep.subr.mxu0 0.0
        %1082 = vmatpush2.msra.mxu0 0.0
        %1083 = vmatprep.subr.mxu0 0.0
        %1084 = vmatpush2.msra.mxu0 0.0
        %1085 = vmatprep.mubr.f32.mxu0 0.0
        %1086 = vmatmul.mubr.f32.gmra.mxu0 %v1019
        %v1087 = vpop.f32.mrf.mxu0
        %v1088 = vadd.f32 0.0, %v1087
        %v1089 = vpop.f32.mrf.mxu0
        %1090 = vdwg.mxu0
        %1092 = vrot.lane.b32.xlu0 %v1088, 16
        %v1093 = vpop.permute.xlu0 %1092
        %vm1095 = vcmask 195712
        %1096 = vst.msk [vmem:[#allocation2] sm:$0xff] %vm1095, %v1093
        %1097 = vrot.lane.b32.xlu0 %v400, 104
        %v1098 = vpop.permute.xlu0 %1097
        %1099 = vrot.lane.b32.xlu0 %v480, 104
        %v1100 = vpop.permute.xlu0 %1099
        %1101 = vrot.lane.b32.xlu0 %v485, 104
        %v1102 = vpop.permute.xlu0 %1101
        %v1103 = vsel %vm573, %v1098, 0
        %v1105 = vsel %vm573, %v1100, 0
        %v1107 = vsel %vm573, %v1102, 0
        %1109 = vmatprep.subr.mxu0 0.0
        %1110 = vmatpush1.xpose.msra.mxu0 0.0
        %1111 = vmatprep.subr.mxu0 0.0
        %1112 = vmatpush1.xpose.msra.mxu0 0.0
        %1113 = vmatprep.subr.mxu0 0.0
        %1114 = vmatpush1.xpose.msra.mxu0 0.0
        %1115 = vmatprep.subr.mxu0 0.0
        %1116 = vmatpush1.xpose.msra.mxu0 0.0
        %1117 = vmatprep.subr.mxu0 0.0
        %1118 = vmatpush1.xpose.msra.mxu0 0.0
        %1119 = vmatprep.subr.mxu0 0.0
        %1120 = vmatpush1.xpose.msra.mxu0 0.0
        %1121 = vmatprep.subr.mxu0 0.0
        %1122 = vmatpush1.xpose.msra.mxu0 0.0
        %1123 = vmatprep.subr.mxu0 0.0
        %1124 = vmatpush1.xpose.msra.mxu0 0.0
        %1125 = vmatprep.subr.mxu0 0.0
        %1126 = vmatpush1.xpose.msra.mxu0 0.0
        %1127 = vmatprep.subr.mxu0 0.0
        %1128 = vmatpush1.xpose.msra.mxu0 0.0
        %1129 = vmatprep.subr.mxu0 0.0
        %1130 = vmatpush1.xpose.msra.mxu0 0.0
        %1131 = vmatprep.subr.mxu0 0.0
        %1132 = vmatpush1.xpose.msra.mxu0 0.0
        %1133 = vmatprep.subr.mxu0 0.0
        %1134 = vmatpush1.xpose.msra.mxu0 0.0
        %1135 = vmatprep.subr.mxu0 0.0
        %1136 = vmatpush1.xpose.msra.mxu0 0.0
        %1137 = vmatprep.subr.mxu0 0.0
        %1138 = vmatpush1.xpose.msra.mxu0 %v1107
        %1139 = vmatprep.subr.mxu0 0.0
        %1140 = vmatpush1.xpose.msra.mxu0 %v1105
        %1141 = vmatprep.subr.mxu0 0.0
        %1142 = vmatpush2.xpose.msra.mxu0 0.0
        %1143 = vmatprep.subr.mxu0 0.0
        %1144 = vmatpush2.xpose.msra.mxu0 0.0
        %1145 = vmatprep.subr.mxu0 0.0
        %1146 = vmatpush2.xpose.msra.mxu0 0.0
        %1147 = vmatprep.subr.mxu0 0.0
        %1148 = vmatpush2.xpose.msra.mxu0 0.0
        %1149 = vmatprep.subr.mxu0 0.0
        %1150 = vmatpush2.xpose.msra.mxu0 0.0
        %1151 = vmatprep.subr.mxu0 0.0
        %1152 = vmatpush2.xpose.msra.mxu0 0.0
        %1153 = vmatprep.subr.mxu0 0.0
        %1154 = vmatpush2.xpose.msra.mxu0 0.0
        %1155 = vmatprep.subr.mxu0 0.0
        %1156 = vmatpush2.xpose.msra.mxu0 0.0
        %1157 = vmatprep.subr.mxu0 0.0
        %1158 = vmatpush2.xpose.msra.mxu0 0.0
        %1159 = vmatprep.subr.mxu0 0.0
        %1160 = vmatpush2.xpose.msra.mxu0 0.0
        %1161 = vmatprep.subr.mxu0 0.0
        %1162 = vmatpush2.xpose.msra.mxu0 0.0
        %1163 = vmatprep.subr.mxu0 0.0
        %1164 = vmatpush2.xpose.msra.mxu0 0.0
        %1165 = vmatprep.subr.mxu0 0.0
        %1166 = vmatpush2.xpose.msra.mxu0 0.0
        %1167 = vmatprep.subr.mxu0 0.0
        %1168 = vmatpush2.xpose.msra.mxu0 0.0
        %1169 = vmatprep.subr.mxu0 0.0
        %1170 = vmatpush2.xpose.msra.mxu0 0.0
        %1171 = vmatprep.subr.mxu0 0.0
        %1172 = vmatpush2.xpose.msra.mxu0 0.0
        %1173 = vmatprep.mubr.f32.mxu0 0.0
        %1174 = vmatmul.mubr.f32.gmra.mxu0 %v1103
        %v1175 = vpop.f32.mrf.mxu0
        %v1176 = vadd.f32 0.0, %v1175
        %v1177 = vpop.f32.mrf.mxu0
        %1178 = vdwg.mxu0
        %v1179 = vsel %vm653, %v1176, -inf
        %1180 = vmax.xlane.f32.xlu0 %v1179
        %v1181 = vpop.xlane.xlu0 %1180
        %v1182 = vsub.f32 %v1176, %v1181
        %v1183 = vmul.f32 %v1182, 1.442695
        %v1184 = vpow.pop %v1183
        %v1185 = vsel %vm653, %v1184, 0.0
        %1186 = vadd.xlane.f32.xlu0 %v1185
        %v1187 = vpop.xlane.xlu0 %1186
        %v1188 = vrcp.pop %v1187
        %v1189 = vmul.f32 %v1184, %v1188
        %1190 = vrot.lane.b32.xlu0 %v565, 104
        %v1191 = vpop.permute.xlu0 %1190
        %1192 = vrot.lane.b32.xlu0 %v570, 104
        %v1193 = vpop.permute.xlu0 %1192
        %v1197 = vsel %vm653, %v1189, 0
        %1199 = vmatprep.subr.mxu0 0.0
        %1200 = vmatpush1.msra.mxu0 0.0
        %1201 = vmatprep.subr.mxu0 0.0
        %1202 = vmatpush1.msra.mxu0 0.0
        %1203 = vmatprep.subr.mxu0 0.0
        %1204 = vmatpush1.msra.mxu0 0.0
        %1205 = vmatprep.subr.mxu0 0.0
        %1206 = vmatpush1.msra.mxu0 0.0
        %1207 = vmatprep.subr.mxu0 0.0
        %1208 = vmatpush1.msra.mxu0 0.0
        %1209 = vmatprep.subr.mxu0 0.0
        %1210 = vmatpush1.msra.mxu0 0.0
        %1211 = vmatprep.subr.mxu0 0.0
        %1212 = vmatpush1.msra.mxu0 0.0
        %1213 = vmatprep.subr.mxu0 0.0
        %1214 = vmatpush1.msra.mxu0 0.0
        %1215 = vmatprep.subr.mxu0 0.0
        %1216 = vmatpush1.msra.mxu0 0.0
        %1217 = vmatprep.subr.mxu0 0.0
        %1218 = vmatpush1.msra.mxu0 0.0
        %1219 = vmatprep.subr.mxu0 0.0
        %1220 = vmatpush1.msra.mxu0 0.0
        %1221 = vmatprep.subr.mxu0 0.0
        %1222 = vmatpush1.msra.mxu0 0.0
        %1223 = vmatprep.subr.mxu0 0.0
        %1224 = vmatpush1.msra.mxu0 0.0
        %1225 = vmatprep.subr.mxu0 0.0
        %1226 = vmatpush1.msra.mxu0 0.0
        %1227 = vmatprep.subr.mxu0 0.0
        %1228 = vmatpush1.msra.mxu0 %v1193
        %1229 = vmatprep.subr.mxu0 0.0
        %1230 = vmatpush1.msra.mxu0 %v1191
        %1231 = vmatprep.subr.mxu0 0.0
        %1232 = vmatpush2.msra.mxu0 0.0
        %1233 = vmatprep.subr.mxu0 0.0
        %1234 = vmatpush2.msra.mxu0 0.0
        %1235 = vmatprep.subr.mxu0 0.0
        %1236 = vmatpush2.msra.mxu0 0.0
        %1237 = vmatprep.subr.mxu0 0.0
        %1238 = vmatpush2.msra.mxu0 0.0
        %1239 = vmatprep.subr.mxu0 0.0
        %1240 = vmatpush2.msra.mxu0 0.0
        %1241 = vmatprep.subr.mxu0 0.0
        %1242 = vmatpush2.msra.mxu0 0.0
        %1243 = vmatprep.subr.mxu0 0.0
        %1244 = vmatpush2.msra.mxu0 0.0
        %1245 = vmatprep.subr.mxu0 0.0
        %1246 = vmatpush2.msra.mxu0 0.0
        %1247 = vmatprep.subr.mxu0 0.0
        %1248 = vmatpush2.msra.mxu0 0.0
        %1249 = vmatprep.subr.mxu0 0.0
        %1250 = vmatpush2.msra.mxu0 0.0
        %1251 = vmatprep.subr.mxu0 0.0
        %1252 = vmatpush2.msra.mxu0 0.0
        %1253 = vmatprep.subr.mxu0 0.0
        %1254 = vmatpush2.msra.mxu0 0.0
        %1255 = vmatprep.subr.mxu0 0.0
        %1256 = vmatpush2.msra.mxu0 0.0
        %1257 = vmatprep.subr.mxu0 0.0
        %1258 = vmatpush2.msra.mxu0 0.0
        %1259 = vmatprep.subr.mxu0 0.0
        %1260 = vmatpush2.msra.mxu0 0.0
        %1261 = vmatprep.subr.mxu0 0.0
        %1262 = vmatpush2.msra.mxu0 0.0
        %1263 = vmatprep.mubr.f32.mxu0 0.0
        %1264 = vmatmul.mubr.f32.gmra.mxu0 %v1197
        %v1265 = vpop.f32.mrf.mxu0
        %v1266 = vadd.f32 0.0, %v1265
        %v1267 = vpop.f32.mrf.mxu0
        %1268 = vdwg.mxu0
        %1270 = vrot.lane.b32.xlu0 %v1266, 24
        %v1271 = vpop.permute.xlu0 %1270
        %vm1273 = vcmask 261312
        %1274 = vst.msk [vmem:[#allocation2] sm:$0xff] %vm1273, %v1271
        %v1275 = vld [vmem:[#allocation2] sm:$0xff]
        %v1276 = vlaneseq
        %v1277 = vshrl.u32 %v1276, 7
        %v1278 = vsub.s32 0, %v1277
        %v1279 = vrot.slane %v318, %v1278
        %v1281 = vsel %vm329, %v1275, 0
        %1283 = vmatprep.subr.mxu0 0.0
        %1284 = vmatpush1.msra.mxu0 0.0
        %1285 = vmatprep.subr.mxu0 0.0
        %1286 = vmatpush1.msra.mxu0 0.0
        %1287 = vmatprep.subr.mxu0 0.0
        %1288 = vmatpush1.msra.mxu0 0.0
        %1289 = vmatprep.subr.mxu0 0.0
        %1290 = vmatpush1.msra.mxu0 0.0
        %1291 = vmatprep.subr.mxu0 0.0
        %1292 = vmatpush1.msra.mxu0 0.0
        %1293 = vmatprep.subr.mxu0 0.0
        %1294 = vmatpush1.msra.mxu0 0.0
        %1295 = vmatprep.subr.mxu0 0.0
        %1296 = vmatpush1.msra.mxu0 0.0
        %1297 = vmatprep.subr.mxu0 0.0
        %1298 = vmatpush1.msra.mxu0 0.0
        %1299 = vmatprep.subr.mxu0 0.0
        %1300 = vmatpush1.msra.mxu0 0.0
        %1301 = vmatprep.subr.mxu0 0.0
        %1302 = vmatpush1.msra.mxu0 0.0
        %1303 = vmatprep.subr.mxu0 0.0
        %1304 = vmatpush1.msra.mxu0 0.0
        %1305 = vmatprep.subr.mxu0 0.0
        %1306 = vmatpush1.msra.mxu0 0.0
        %1307 = vmatprep.subr.mxu0 0.0
        %1308 = vmatpush1.msra.mxu0 %v302
        %1309 = vmatprep.subr.mxu0 0.0
        %1310 = vmatpush1.msra.mxu0 %v301
        %1311 = vmatprep.subr.mxu0 0.0
        %1312 = vmatpush1.msra.mxu0 %v300
        %1313 = vmatprep.subr.mxu0 0.0
        %1314 = vmatpush1.msra.mxu0 %v299
        %1315 = vmatprep.subr.mxu0 0.0
        %1316 = vmatpush2.msra.mxu0 0.0
        %1317 = vmatprep.subr.mxu0 0.0
        %1318 = vmatpush2.msra.mxu0 0.0
        %1319 = vmatprep.subr.mxu0 0.0
        %1320 = vmatpush2.msra.mxu0 0.0
        %1321 = vmatprep.subr.mxu0 0.0
        %1322 = vmatpush2.msra.mxu0 0.0
        %1323 = vmatprep.subr.mxu0 0.0
        %1324 = vmatpush2.msra.mxu0 0.0
        %1325 = vmatprep.subr.mxu0 0.0
        %1326 = vmatpush2.msra.mxu0 0.0
        %1327 = vmatprep.subr.mxu0 0.0
        %1328 = vmatpush2.msra.mxu0 0.0
        %1329 = vmatprep.subr.mxu0 0.0
        %1330 = vmatpush2.msra.mxu0 0.0
        %1331 = vmatprep.subr.mxu0 0.0
        %1332 = vmatpush2.msra.mxu0 0.0
        %1333 = vmatprep.subr.mxu0 0.0
        %1334 = vmatpush2.msra.mxu0 0.0
        %1335 = vmatprep.subr.mxu0 0.0
        %1336 = vmatpush2.msra.mxu0 0.0
        %1337 = vmatprep.subr.mxu0 0.0
        %1338 = vmatpush2.msra.mxu0 0.0
        %1339 = vmatprep.subr.mxu0 0.0
        %1340 = vmatpush2.msra.mxu0 0.0
        %1341 = vmatprep.subr.mxu0 0.0
        %1342 = vmatpush2.msra.mxu0 0.0
        %1343 = vmatprep.subr.mxu0 0.0
        %1344 = vmatpush2.msra.mxu0 0.0
        %1345 = vmatprep.subr.mxu0 0.0
        %1346 = vmatpush2.msra.mxu0 0.0
        %1347 = vmatprep.mubr.f32.mxu0 0.0
        %1348 = vmatmul.mubr.f32.gmra.mxu0 %v1281
        %v1349 = vpop.f32.mrf.mxu0
        %v1350 = vadd.f32 %v1279, %v1349
        %v1351 = vpop.f32.mrf.mxu0
        %1352 = vdwg.mxu0
        %v1353 = vadd.f32 %v276, %v1350
        %v1354 = vsel %vm329, %v1353, 0.0
        %1355 = vadd.xlane.f32.xlu0 %v1354
        %v1356 = vpop.xlane.xlu0 %1355
        %v1357 = vrcp.pop 32.0
        %v1358 = vmul.f32 %v1356, %v1357
        %v1359 = vsub.f32 %v1353, %v1358
        %v1360 = vmul.f32 %v1359, %v1359
        %v1361 = vsel %vm329, %v1360, 0.0
        %1362 = vadd.xlane.f32.xlu0 %v1361
        %v1363 = vpop.xlane.xlu0 %1362
        %v1364 = vmul.f32 %v1363, %v1357
        %v1365 = vadd.f32 %v1364, 1e-05
        %v1366 = vrsqrt.pop %v1365
        %v1367 = vmul.f32 %v1359, %v1366
        %v1368 = vlaneseq
        %v1369 = vshrl.u32 %v1368, 7
        %v1370 = vsub.s32 0, %v1369
        %v1371 = vrot.slane %v321, %v1370
        %v1372 = vmul.f32 %v1367, %v1371
        %v1373 = vlaneseq
        %v1374 = vshrl.u32 %v1373, 7
        %v1375 = vsub.s32 0, %v1374
        %v1376 = vrot.slane %v322, %v1375
        %v1377 = vadd.f32 %v1372, %v1376
        %v1378 = vlaneseq
        %v1379 = vshrl.u32 %v1378, 7
        %v1380 = vsub.s32 0, %v1379
        %v1381 = vrot.slane %v319, %v1380
        %v1383 = vsel %vm329, %v1377, 0
        %1385 = vmatprep.subr.mxu0 0.0
        %1386 = vmatpush1.msra.mxu0 0.0
        %1387 = vmatprep.subr.mxu0 0.0
        %1388 = vmatpush1.msra.mxu0 0.0
        %1389 = vmatprep.subr.mxu0 0.0
        %1390 = vmatpush1.msra.mxu0 0.0
        %1391 = vmatprep.subr.mxu0 0.0
        %1392 = vmatpush1.msra.mxu0 0.0
        %1393 = vmatprep.subr.mxu0 0.0
        %1394 = vmatpush1.msra.mxu0 0.0
        %1395 = vmatprep.subr.mxu0 0.0
        %1396 = vmatpush1.msra.mxu0 0.0
        %1397 = vmatprep.subr.mxu0 0.0
        %1398 = vmatpush1.msra.mxu0 0.0
        %1399 = vmatprep.subr.mxu0 0.0
        %1400 = vmatpush1.msra.mxu0 0.0
        %1401 = vmatprep.subr.mxu0 0.0
        %1402 = vmatpush1.msra.mxu0 0.0
        %1403 = vmatprep.subr.mxu0 0.0
        %1404 = vmatpush1.msra.mxu0 0.0
        %1405 = vmatprep.subr.mxu0 0.0
        %1406 = vmatpush1.msra.mxu0 0.0
        %1407 = vmatprep.subr.mxu0 0.0
        %1408 = vmatpush1.msra.mxu0 0.0
        %1409 = vmatprep.subr.mxu0 0.0
        %1410 = vmatpush1.msra.mxu0 %v306
        %1411 = vmatprep.subr.mxu0 0.0
        %1412 = vmatpush1.msra.mxu0 %v305
        %1413 = vmatprep.subr.mxu0 0.0
        %1414 = vmatpush1.msra.mxu0 %v304
        %1415 = vmatprep.subr.mxu0 0.0
        %1416 = vmatpush1.msra.mxu0 %v303
        %1417 = vmatprep.subr.mxu0 0.0
        %1418 = vmatpush2.msra.mxu0 0.0
        %1419 = vmatprep.subr.mxu0 0.0
        %1420 = vmatpush2.msra.mxu0 0.0
        %1421 = vmatprep.subr.mxu0 0.0
        %1422 = vmatpush2.msra.mxu0 0.0
        %1423 = vmatprep.subr.mxu0 0.0
        %1424 = vmatpush2.msra.mxu0 0.0
        %1425 = vmatprep.subr.mxu0 0.0
        %1426 = vmatpush2.msra.mxu0 0.0
        %1427 = vmatprep.subr.mxu0 0.0
        %1428 = vmatpush2.msra.mxu0 0.0
        %1429 = vmatprep.subr.mxu0 0.0
        %1430 = vmatpush2.msra.mxu0 0.0
        %1431 = vmatprep.subr.mxu0 0.0
        %1432 = vmatpush2.msra.mxu0 0.0
        %1433 = vmatprep.subr.mxu0 0.0
        %1434 = vmatpush2.msra.mxu0 0.0
        %1435 = vmatprep.subr.mxu0 0.0
        %1436 = vmatpush2.msra.mxu0 0.0
        %1437 = vmatprep.subr.mxu0 0.0
        %1438 = vmatpush2.msra.mxu0 0.0
        %1439 = vmatprep.subr.mxu0 0.0
        %1440 = vmatpush2.msra.mxu0 0.0
        %1441 = vmatprep.subr.mxu0 0.0
        %1442 = vmatpush2.msra.mxu0 0.0
        %1443 = vmatprep.subr.mxu0 0.0
        %1444 = vmatpush2.msra.mxu0 0.0
        %1445 = vmatprep.subr.mxu0 0.0
        %1446 = vmatpush2.msra.mxu0 0.0
        %1447 = vmatprep.subr.mxu0 0.0
        %1448 = vmatpush2.msra.mxu0 0.0
        %1449 = vmatprep.mubr.f32.mxu0 0.0
        %1450 = vmatmul.mubr.f32.gmra.mxu0 %v1383
        %v1451 = vpop.f32.mrf.mxu0
        %v1452 = vadd.f32 %v1381, %v1451
        %v1453 = vpop.f32.mrf.mxu0
        %1454 = vdwg.mxu0
        %v1455 = vmax.f32 %v1452, 0.0
        %v1456 = vlaneseq
        %v1457 = vshrl.u32 %v1456, 7
        %v1458 = vsub.s32 0, %v1457
        %v1459 = vrot.slane %v320, %v1458
        %vm1460 = vcmask 523264
        %v1462 = vsel %vm1460, %v1455, 0
        %1464 = vmatprep.subr.mxu0 0.0
        %1465 = vmatpush1.msra.mxu0 0.0
        %1466 = vmatprep.subr.mxu0 0.0
        %1467 = vmatpush1.msra.mxu0 0.0
        %1468 = vmatprep.subr.mxu0 0.0
        %1469 = vmatpush1.msra.mxu0 0.0
        %1470 = vmatprep.subr.mxu0 0.0
        %1471 = vmatpush1.msra.mxu0 0.0
        %1472 = vmatprep.subr.mxu0 0.0
        %1473 = vmatpush1.msra.mxu0 0.0
        %1474 = vmatprep.subr.mxu0 0.0
        %1475 = vmatpush1.msra.mxu0 0.0
        %1476 = vmatprep.subr.mxu0 0.0
        %1477 = vmatpush1.msra.mxu0 0.0
        %1478 = vmatprep.subr.mxu0 0.0
        %1479 = vmatpush1.msra.mxu0 0.0
        %1480 = vmatprep.subr.mxu0 0.0
        %1481 = vmatpush1.msra.mxu0 %v314
        %1482 = vmatprep.subr.mxu0 0.0
        %1483 = vmatpush1.msra.mxu0 %v313
        %1484 = vmatprep.subr.mxu0 0.0
        %1485 = vmatpush1.msra.mxu0 %v312
        %1486 = vmatprep.subr.mxu0 0.0
        %1487 = vmatpush1.msra.mxu0 %v311
        %1488 = vmatprep.subr.mxu0 0.0
        %1489 = vmatpush1.msra.mxu0 %v310
        %1490 = vmatprep.subr.mxu0 0.0
        %1491 = vmatpush1.msra.mxu0 %v309
        %1492 = vmatprep.subr.mxu0 0.0
        %1493 = vmatpush1.msra.mxu0 %v308
        %1494 = vmatprep.subr.mxu0 0.0
        %1495 = vmatpush1.msra.mxu0 %v307
        %1496 = vmatprep.subr.mxu0 0.0
        %1497 = vmatpush2.msra.mxu0 0.0
        %1498 = vmatprep.subr.mxu0 0.0
        %1499 = vmatpush2.msra.mxu0 0.0
        %1500 = vmatprep.subr.mxu0 0.0
        %1501 = vmatpush2.msra.mxu0 0.0
        %1502 = vmatprep.subr.mxu0 0.0
        %1503 = vmatpush2.msra.mxu0 0.0
        %1504 = vmatprep.subr.mxu0 0.0
        %1505 = vmatpush2.msra.mxu0 0.0
        %1506 = vmatprep.subr.mxu0 0.0
        %1507 = vmatpush2.msra.mxu0 0.0
        %1508 = vmatprep.subr.mxu0 0.0
        %1509 = vmatpush2.msra.mxu0 0.0
        %1510 = vmatprep.subr.mxu0 0.0
        %1511 = vmatpush2.msra.mxu0 0.0
        %1512 = vmatprep.subr.mxu0 0.0
        %1513 = vmatpush2.msra.mxu0 0.0
        %1514 = vmatprep.subr.mxu0 0.0
        %1515 = vmatpush2.msra.mxu0 0.0
        %1516 = vmatprep.subr.mxu0 0.0
        %1517 = vmatpush2.msra.mxu0 0.0
        %1518 = vmatprep.subr.mxu0 0.0
        %1519 = vmatpush2.msra.mxu0 0.0
        %1520 = vmatprep.subr.mxu0 0.0
        %1521 = vmatpush2.msra.mxu0 0.0
        %1522 = vmatprep.subr.mxu0 0.0
        %1523 = vmatpush2.msra.mxu0 0.0
        %1524 = vmatprep.subr.mxu0 0.0
        %1525 = vmatpush2.msra.mxu0 0.0
        %1526 = vmatprep.subr.mxu0 0.0
        %1527 = vmatpush2.msra.mxu0 0.0
        %1528 = vmatprep.mubr.f32.mxu0 0.0
        %1529 = vmatmul.mubr.f32.gmra.mxu0 %v1462
        %v1530 = vpop.f32.mrf.mxu0
        %v1531 = vadd.f32 %v1459, %v1530
        %v1532 = vpop.f32.mrf.mxu0
        %1533 = vdwg.mxu0
        %v1534 = vadd.f32 %v1377, %v1531
        %v1535 = vsel %vm329, %v1534, 0.0
        %1536 = vadd.xlane.f32.xlu0 %v1535
        %v1537 = vpop.xlane.xlu0 %1536
        %v1538 = vmul.f32 %v1537, %v1357
        %v1539 = vsub.f32 %v1534, %v1538
        %v1540 = vmul.f32 %v1539, %v1539
        %v1541 = vsel %vm329, %v1540, 0.0
        %1542 = vadd.xlane.f32.xlu0 %v1541
        %v1543 = vpop.xlane.xlu0 %1542
        %v1544 = vmul.f32 %v1543, %v1357
        %v1545 = vadd.f32 %v1544, 1e-05
        %v1546 = vrsqrt.pop %v1545
        %v1547 = vmul.f32 %v1539, %v1546
        %v1548 = vlaneseq
        %v1549 = vshrl.u32 %v1548, 7
        %v1550 = vsub.s32 0, %v1549
        %v1551 = vrot.slane %v323, %v1550
        %v1552 = vmul.f32 %v1547, %v1551
        %v1553 = vlaneseq
        %v1554 = vshrl.u32 %v1553, 7
        %v1555 = vsub.s32 0, %v1554
        %v1556 = vrot.slane %v324, %v1555
        %v1557 = vadd.f32 %v1552, %v1556
        %1558 = vst.msk [vmem:[%s275] sm:$0xff] %vm329, %v1557
        %s1559 = sand.u32 %s98, 1
        %s1560 = scalar_lea.sflag [#allocation6], %s1559
        %s1561 = sand.u32 %s98, 1
        %s1562 = smul.addr %s1561, 8
        %s1563 = scalar_lea.vmem [#allocation5], %s1562
        // Predicated region
        $region109: #{tpu_custom_call.1} parent=99 // pred_check
          %p1564 = pneg %p108
        $region110: #{tpu_custom_call.1} parent=99 // pred_check_branch
          %1566 = sbr.rel (%p1564) target = $region112
        $region111: #{tpu_custom_call.1} parent=99 // pred_region
          %s1568 = ssub.s32 128, 128
          %1569 = vsyncadd %s1560, %s1568
          %s1570 = smul.addr %s17, 128
          %s1571 = scalar_lea.hbm %s3, %s1570
          %s1573 = sshll.u32 %s1563, 4
          %s1574 = int_to_ptr.vmem [resolvable:$true] %s1573
          %1576 = dma.vmem_to_hbm [thread:$0]  %s1574, 128, %s1571, %s1560
        $region112: #{tpu_custom_call.1} parent=99 // pred_fallthru
          _
      $region100: #{tpu_custom_call.1} parent=5 // pred_fallthru
        _
      %p1577 = scmp.le.s32.totalorder 2, %s12
      // Predicated region
      $region113: #{tpu_custom_call.1} parent=5 // pred_check
        %p1578 = pneg %p1577
      $region114: #{tpu_custom_call.1} parent=5 // pred_check_branch
        %1580 = sbr.rel (%p1578) target = $region116
      $region115: #{tpu_custom_call.1} parent=5 // pred_region
        %s1581 = ssub.s32 %s12, 2
        // Predicated region
        $region117: #{tpu_custom_call.1} parent=115 // pred_check
          %p1582 = pneg %p114
        $region118: #{tpu_custom_call.1} parent=115 // pred_check_branch
          %1584 = sbr.rel (%p1582) target = $region120
        $region119: #{tpu_custom_call.1} parent=115 // pred_region
          %s1585 = sand.u32 %s99, 1
          %s1586 = scalar_lea.sflag [#allocation6], %s1585
          %s1587 = sand.u32 %s99, 1
          %s1588 = smul.addr %s1587, 8
          %s1589 = scalar_lea.vmem [#allocation5], %s1588
          %1590 = dma.done %s1586, 128
        $region120: #{tpu_custom_call.1} parent=115 // pred_fallthru
          _
      $region116: #{tpu_custom_call.1} parent=5 // pred_fallthru
        _
    $region6: #{tpu_custom_call.1} parent=1 // loop_footer
      %s16 = sadd.s32 1, %s12
    $region7: #{tpu_custom_call.1} parent=1 // loop_footer_branch
      %11 = sbr.rel target = $region3
    $region8: #{tpu_custom_call.1} parent=1 // loop_exit
      _
    %1591 = vsyncpa [#allocation6], 1
    %s1592 = scalar_lea.sflag [#allocation6], 1
    %1593 = vsyncpa %s1592, 1

</llo_original>
